<compile_context>
chip_gen: v5e
topology: v5e:2x2
jax: 0.10.0
libtpu: 0.0.40
codegen_flags: <defaults>
</compile_context>

<pallas_src>
import functools

import jax
import jax.numpy as jnp
from jax import lax
from jax.experimental import pallas as pl
from jax.experimental.pallas import tpu as pltpu

_SQRT_HALF = 0.7071067811865476


def _erf(x):
    # Abramowitz & Stegun 7.1.26, |error| <= 1.5e-7 vs exact erf. Only uses
    # exp / divide / mul / add / where, all of which lower cleanly in Mosaic.
    a1, a2, a3, a4, a5 = (0.254829592, -0.284496736, 1.421413741,
                          -1.453152027, 1.061405429)
    p = 0.3275911
    ax = jnp.abs(x)
    t = 1.0 / (1.0 + p * ax)
    poly = ((((a5 * t + a4) * t + a3) * t + a2) * t + a1) * t
    y = 1.0 - poly * jnp.exp(-ax * ax)
    return jnp.where(x < 0.0, -y, y)


def _gelu_exact(x):
    # Matches PyTorch nn.GELU() default (erf-GELU) to ~1e-7.
    return 0.5 * x * (1.0 + _erf(x * _SQRT_HALF))


def _mlp_kernel(x_ref, wm1_ref, pw1_ref, pb1_ref, wm2_ref, pw2_ref, pb2_ref,
                o_ref, h_ref, *, H, W, tb, c_in, hidden, c_out):
    # x_ref  : (tb*c_in,  H*W)  batch*channel packed on sublanes, spatial on lanes
    # wmN_ref: (9, tb*C, H*W)   depthwise 3x3 weights with zero-pad masks folded in
    # pwN_ref: (Cout, Cin)      pointwise 1x1 weights
    # pbN_ref: (Cout, 1)        pointwise bias (depthwise bias already folded in)
    # o_ref  : (tb*c_out, H*W)
    # h_ref  : (tb*hidden, H*W) VMEM scratch holding the fc1 activation
    HW = H * W
    x = x_ref[...].astype(jnp.float32)

    def depthwise3x3(xc, wm_ref):
        # 3x3 "same" depthwise conv: 8 lane rotations (XLU slot) + 9 fused
        # masked-weight MACs (VPU slot). No iota/mask build, no padded scratch,
        # no unaligned slices.
        acc = wm_ref[4] * xc                        # centre tap (dy=0, dx=0)
        for k in range(9):
            if k == 4:
                continue
            dy, dx = k // 3 - 1, k % 3 - 1
            s = dy * W + dx                         # flat neighbour offset
            acc = acc + wm_ref[k] * pltpu.roll(xc, (-s) % HW, 1)
        return acc

    def pointwise1x1_piece(xc, w, b, cin, t):
        # One batch element's (cout, H*W) of the 1x1 conv as exact-f32 VPU
        # broadcast MACs (channel counts here are tiny: 4/8).
        base = t * cin
        acc = w[:, 0:1] * xc[base:base + 1, :]
        for ic in range(1, cin):
            acc = acc + w[:, ic:ic + 1] * xc[base + ic:base + ic + 1, :]
        return acc + b

    # ---- fc1: depthwise -> pointwise -> exact erf-GELU --------------------
    d1 = depthwise3x3(x, wm1_ref)
    pw1 = pw1_ref[...].astype(jnp.float32)
    pb1 = pb1_ref[...].astype(jnp.float32)
    for t in range(tb):
        piece = pointwise1x1_piece(d1, pw1, pb1, c_in, t)
        h_ref[t * hidden:(t + 1) * hidden, :] = _gelu_exact(piece)

    # ---- fc2: depthwise -> pointwise, written straight to the output ------
    d2 = depthwise3x3(h_ref[...], wm2_ref)
    pw2 = pw2_ref[...].astype(jnp.float32)
    pb2 = pb2_ref[...].astype(jnp.float32)
    for t in range(tb):
        piece = pointwise1x1_piece(d2, pw2, pb2, hidden, t)
        o_ref[t * c_out:(t + 1) * c_out, :] = piece.astype(o_ref.dtype)


def _pick_batch_tile(B, channel_counts):
    """Smallest divisor of B making tb*C a multiple of 8 for every channel count
    (full sublanes, unmasked stores). Falls back to the whole batch, in which
    case the blocks equal the full array dims (always a legal BlockSpec)."""
    for tb in range(1, B + 1):
        if B % tb == 0 and all((tb * c) % 8 == 0 for c in channel_counts):
            return tb
    return B


def mlp_forward(x, params, *, tb=None):
    """x: (B, C_in, H, W) f32; params = (dw1_w, dw1_b, pw1_w, pw1_b,
                                          dw2_w, dw2_b, pw2_w, pw2_b)."""
    (dw1_w, dw1_b, pw1_w, pw1_b, dw2_w, dw2_b, pw2_w, pw2_b) = params
    B, C_in, H, W = x.shape
    HW = H * W
    hidden, C_out = pw1_w.shape[0], pw2_w.shape[0]
    assert HW % 128 == 0, "H*W must be a multiple of 128 for lane-dense tiling"

    if tb is None:
        tb = _pick_batch_tile(B, (C_in, hidden, C_out))
    assert B % tb == 0
    f32 = jnp.float32

    # ---- host-side precompute (exact; outside the kernel) -----------------
    # 3x3 "same"-padding validity masks over the flattened H*W axis, folded into
    # the depthwise weights and tiled by tb so rows line up with (tb*C, HW).
    r = jnp.arange(HW, dtype=jnp.int32) // W
    c = jnp.arange(HW, dtype=jnp.int32) % W
    masks = []
    for dy in (-1, 0, 1):
        rv = (r + dy >= 0) & (r + dy < H)
        for dx in (-1, 0, 1):
            cv = (c + dx >= 0) & (c + dx < W)
            masks.append((rv & cv).astype(f32))
    masks = jnp.stack(masks)                                    # (9, HW)

    def fold_depthwise(dw_w):
        C = dw_w.shape[0]
        w9 = dw_w.reshape(C, 9).astype(f32)                     # (C, 9)
        wm = w9.T[:, :, None] * masks[:, None, :]               # (9, C, HW)
        return jnp.tile(wm, (1, tb, 1))                         # (9, tb*C, HW)

    wm1 = fold_depthwise(dw1_w)
    wm2 = fold_depthwise(dw2_w)

    # Depthwise bias folded into the (linear) pointwise conv: pb' = pb + pw @ db.
    pb1_eff = (pw1_b.astype(f32) + pw1_w.astype(f32) @ dw1_b.astype(f32)).reshape(hidden, 1)
    pb2_eff = (pw2_b.astype(f32) + pw2_w.astype(f32) @ dw2_b.astype(f32)).reshape(C_out, 1)

    args = (
        x.reshape(B * C_in, HW),
        wm1, pw1_w.astype(f32), pb1_eff,
        wm2, pw2_w.astype(f32), pb2_eff,
    )

    def const_spec(a):  # small weights: full block, constant index map
        nd = a.ndim
        return pl.BlockSpec(a.shape, lambda i, _nd=nd: (0,) * _nd)

    out = pl.pallas_call(
        functools.partial(_mlp_kernel, H=H, W=W, tb=tb, c_in=C_in,
                          hidden=hidden, c_out=C_out),
        out_shape=jax.ShapeDtypeStruct((B * C_out, HW), x.dtype),
        grid=(B // tb,),
        in_specs=[pl.BlockSpec((tb * C_in, HW), lambda i: (i, 0))]
                 + [const_spec(a) for a in args[1:]],
        out_specs=pl.BlockSpec((tb * C_out, HW), lambda i: (i, 0)),
        scratch_shapes=[pltpu.VMEM((tb * hidden, HW), jnp.float32)],
        compiler_params=pltpu.CompilerParams(
            dimension_semantics=("parallel",)),
    )(*args)
    return out.reshape(B, C_out, H, W)


if __name__ == "__main__":
    B, C_in, H, W = 2, 4, 16, 16
    hidden = 8
    C_out = C_in  # Mlp default: out_features = in_features

    key = jax.random.PRNGKey(0)
    ks = jax.random.split(key, 9)
    x = jax.random.normal(ks[0], (B, C_in, H, W), jnp.float32)
    dw1_w = jax.random.normal(ks[1], (C_in, 3, 3), jnp.float32) * 0.3
    dw1_b = jax.random.normal(ks[2], (C_in,), jnp.float32) * 0.1
    pw1_w = jax.random.normal(ks[3], (hidden, C_in), jnp.float32) * 0.3
    pw1_b = jax.random.normal(ks[4], (hidden,), jnp.float32) * 0.1
    dw2_w = jax.random.normal(ks[5], (hidden, 3, 3), jnp.float32) * 0.3
    dw2_b = jax.random.normal(ks[6], (hidden,), jnp.float32) * 0.1
    pw2_w = jax.random.normal(ks[7], (C_out, hidden), jnp.float32) * 0.3
    pw2_b = jax.random.normal(ks[8], (C_out,), jnp.float32) * 0.1
    params = (dw1_w, dw1_b, pw1_w, pw1_b, dw2_w, dw2_b, pw2_w, pw2_b)

    out = jax.block_until_ready(mlp_forward(x, params))

    # pure-JAX reference: depthwise 3x3 + pointwise 1x1, exact erf-GELU
    # (matching PyTorch nn.GELU() default).
    def dwconv(z, wt, bi):
        y = lax.conv_general_dilated(
            z, wt[:, None, :, :], (1, 1), [(1, 1), (1, 1)],
            dimension_numbers=("NCHW", "OIHW", "NCHW"),
            feature_group_count=z.shape[1],
            precision=lax.Precision.HIGHEST)
        return y + bi[None, :, None, None]

    def pwconv(z, wt, bi):
        y = lax.conv_general_dilated(
            z, wt[:, :, None, None], (1, 1), [(0, 0), (0, 0)],
            dimension_numbers=("NCHW", "OIHW", "NCHW"),
            precision=lax.Precision.HIGHEST)
        return y + bi[None, :, None, None]

    ref = pwconv(dwconv(x, dw1_w, dw1_b), pw1_w, pw1_b)
    ref = jax.nn.gelu(ref, approximate=False)
    ref = pwconv(dwconv(ref, dw2_w, dw2_b), pw2_w, pw2_b)

    assert out.shape == (B, C_out, H, W)
    err = jnp.max(jnp.abs(out - ref))
    assert err < 2e-4, f"max abs err {err}"

    print("KERNEL_OK")
</pallas_src>

<mosaic_0001>
module attributes {stable_mosaic.version = 11 : i64} {
  func.func @_mlp_kernel(%arg0: i32, %arg1: memref<8x256xf32, #tpu.memory_space<vmem>>, %arg2: memref<9x8x256xf32, #tpu.memory_space<vmem>>, %arg3: memref<8x4xf32, #tpu.memory_space<vmem>>, %arg4: memref<8x1xf32, #tpu.memory_space<vmem>>, %arg5: memref<9x16x256xf32, #tpu.memory_space<vmem>>, %arg6: memref<4x8xf32, #tpu.memory_space<vmem>>, %arg7: memref<4x1xf32, #tpu.memory_space<vmem>>, %arg8: memref<8x256xf32, #tpu.memory_space<vmem>>, %arg9: memref<16x256xf32, #tpu.memory_space<vmem>>) attributes {dimension_semantics = [#tpu.dimension_semantics<parallel>], iteration_bounds = array<i64: 1>, scalar_prefetch = 0 : i64, scratch_operands = 1 : i64, tpu.core_type = #tpu.core_type<tc>, window_params = [{transform_indices = @transform_0, window_bounds = array<i64: 8, 256>}, {pipeline_mode = #tpu.pipeline_mode<synchronous>, transform_indices = @transform_1, window_bounds = array<i64: 9, 8, 256>}, {pipeline_mode = #tpu.pipeline_mode<synchronous>, transform_indices = @transform_2, window_bounds = array<i64: 8, 4>}, {pipeline_mode = #tpu.pipeline_mode<synchronous>, transform_indices = @transform_3, window_bounds = array<i64: 8, 1>}, {pipeline_mode = #tpu.pipeline_mode<synchronous>, transform_indices = @transform_4, window_bounds = array<i64: 9, 16, 256>}, {pipeline_mode = #tpu.pipeline_mode<synchronous>, transform_indices = @transform_5, window_bounds = array<i64: 4, 8>}, {pipeline_mode = #tpu.pipeline_mode<synchronous>, transform_indices = @transform_6, window_bounds = array<i64: 4, 1>}, {transform_indices = @transform_7, window_bounds = array<i64: 8, 256>}]} {
    %c0 = arith.constant 0 : index
    %c0_0 = arith.constant 0 : index
    %0 = vector.load %arg1[%c0, %c0_0] : memref<8x256xf32, #tpu.memory_space<vmem>>, vector<8x256xf32>
    %c4 = arith.constant 4 : index
    %c0_1 = arith.constant 0 : index
    %c0_2 = arith.constant 0 : index
    %1 = vector.load %arg2[%c4, %c0_1, %c0_2] : memref<9x8x256xf32, #tpu.memory_space<vmem>>, vector<1x8x256xf32>
    %2 = vector.shape_cast %1 : vector<1x8x256xf32> to vector<8x256xf32>
    %3 = arith.mulf %2, %0 : vector<8x256xf32>
    %c0_3 = arith.constant 0 : index
    %c0_4 = arith.constant 0 : index
    %c0_5 = arith.constant 0 : index
    %4 = vector.load %arg2[%c0_3, %c0_4, %c0_5] : memref<9x8x256xf32, #tpu.memory_space<vmem>>, vector<1x8x256xf32>
    %5 = vector.shape_cast %4 : vector<1x8x256xf32> to vector<8x256xf32>
    %c17_i32 = arith.constant 17 : i32
    %6 = tpu.dynamic_rotate %0 by %c17_i32 dim 1 : vector<8x256xf32>, i32 -> vector<8x256xf32>
    %7 = arith.mulf %5, %6 : vector<8x256xf32>
    %8 = arith.addf %3, %7 : vector<8x256xf32>
    %c1 = arith.constant 1 : index
    %c0_6 = arith.constant 0 : index
    %c0_7 = arith.constant 0 : index
    %9 = vector.load %arg2[%c1, %c0_6, %c0_7] : memref<9x8x256xf32, #tpu.memory_space<vmem>>, vector<1x8x256xf32>
    %10 = vector.shape_cast %9 : vector<1x8x256xf32> to vector<8x256xf32>
    %c16_i32 = arith.constant 16 : i32
    %11 = tpu.dynamic_rotate %0 by %c16_i32 dim 1 : vector<8x256xf32>, i32 -> vector<8x256xf32>
    %12 = arith.mulf %10, %11 : vector<8x256xf32>
    %13 = arith.addf %8, %12 : vector<8x256xf32>
    %c2 = arith.constant 2 : index
    %c0_8 = arith.constant 0 : index
    %c0_9 = arith.constant 0 : index
    %14 = vector.load %arg2[%c2, %c0_8, %c0_9] : memref<9x8x256xf32, #tpu.memory_space<vmem>>, vector<1x8x256xf32>
    %15 = vector.shape_cast %14 : vector<1x8x256xf32> to vector<8x256xf32>
    %c15_i32 = arith.constant 15 : i32
    %16 = tpu.dynamic_rotate %0 by %c15_i32 dim 1 : vector<8x256xf32>, i32 -> vector<8x256xf32>
    %17 = arith.mulf %15, %16 : vector<8x256xf32>
    %18 = arith.addf %13, %17 : vector<8x256xf32>
    %c3 = arith.constant 3 : index
    %c0_10 = arith.constant 0 : index
    %c0_11 = arith.constant 0 : index
    %19 = vector.load %arg2[%c3, %c0_10, %c0_11] : memref<9x8x256xf32, #tpu.memory_space<vmem>>, vector<1x8x256xf32>
    %20 = vector.shape_cast %19 : vector<1x8x256xf32> to vector<8x256xf32>
    %c1_i32 = arith.constant 1 : i32
    %21 = tpu.dynamic_rotate %0 by %c1_i32 dim 1 : vector<8x256xf32>, i32 -> vector<8x256xf32>
    %22 = arith.mulf %20, %21 : vector<8x256xf32>
    %23 = arith.addf %18, %22 : vector<8x256xf32>
    %c5 = arith.constant 5 : index
    %c0_12 = arith.constant 0 : index
    %c0_13 = arith.constant 0 : index
    %24 = vector.load %arg2[%c5, %c0_12, %c0_13] : memref<9x8x256xf32, #tpu.memory_space<vmem>>, vector<1x8x256xf32>
    %25 = vector.shape_cast %24 : vector<1x8x256xf32> to vector<8x256xf32>
    %c255_i32 = arith.constant 255 : i32
    %26 = tpu.dynamic_rotate %0 by %c255_i32 dim 1 : vector<8x256xf32>, i32 -> vector<8x256xf32>
    %27 = arith.mulf %25, %26 : vector<8x256xf32>
    %28 = arith.addf %23, %27 : vector<8x256xf32>
    %c6 = arith.constant 6 : index
    %c0_14 = arith.constant 0 : index
    %c0_15 = arith.constant 0 : index
    %29 = vector.load %arg2[%c6, %c0_14, %c0_15] : memref<9x8x256xf32, #tpu.memory_space<vmem>>, vector<1x8x256xf32>
    %30 = vector.shape_cast %29 : vector<1x8x256xf32> to vector<8x256xf32>
    %c241_i32 = arith.constant 241 : i32
    %31 = tpu.dynamic_rotate %0 by %c241_i32 dim 1 : vector<8x256xf32>, i32 -> vector<8x256xf32>
    %32 = arith.mulf %30, %31 : vector<8x256xf32>
    %33 = arith.addf %28, %32 : vector<8x256xf32>
    %c7 = arith.constant 7 : index
    %c0_16 = arith.constant 0 : index
    %c0_17 = arith.constant 0 : index
    %34 = vector.load %arg2[%c7, %c0_16, %c0_17] : memref<9x8x256xf32, #tpu.memory_space<vmem>>, vector<1x8x256xf32>
    %35 = vector.shape_cast %34 : vector<1x8x256xf32> to vector<8x256xf32>
    %c240_i32 = arith.constant 240 : i32
    %36 = tpu.dynamic_rotate %0 by %c240_i32 dim 1 : vector<8x256xf32>, i32 -> vector<8x256xf32>
    %37 = arith.mulf %35, %36 : vector<8x256xf32>
    %38 = arith.addf %33, %37 : vector<8x256xf32>
    %c8 = arith.constant 8 : index
    %c0_18 = arith.constant 0 : index
    %c0_19 = arith.constant 0 : index
    %39 = vector.load %arg2[%c8, %c0_18, %c0_19] : memref<9x8x256xf32, #tpu.memory_space<vmem>>, vector<1x8x256xf32>
    %40 = vector.shape_cast %39 : vector<1x8x256xf32> to vector<8x256xf32>
    %c239_i32 = arith.constant 239 : i32
    %41 = tpu.dynamic_rotate %0 by %c239_i32 dim 1 : vector<8x256xf32>, i32 -> vector<8x256xf32>
    %42 = arith.mulf %40, %41 : vector<8x256xf32>
    %43 = arith.addf %38, %42 : vector<8x256xf32>
    %c0_20 = arith.constant 0 : index
    %c0_21 = arith.constant 0 : index
    %44 = vector.load %arg3[%c0_20, %c0_21] : memref<8x4xf32, #tpu.memory_space<vmem>>, vector<8x4xf32>
    %c0_22 = arith.constant 0 : index
    %c0_23 = arith.constant 0 : index
    %45 = vector.load %arg4[%c0_22, %c0_23] : memref<8x1xf32, #tpu.memory_space<vmem>>, vector<8x1xf32>
    %46 = vector.extract_strided_slice %44 {offsets = [0, 0], sizes = [8, 1], strides = [1, 1]} : vector<8x4xf32> to vector<8x1xf32>
    %47 = vector.extract_strided_slice %43 {offsets = [0, 0], sizes = [1, 256], strides = [1, 1]} : vector<8x256xf32> to vector<1x256xf32>
    %48 = vector.broadcast %46 : vector<8x1xf32> to vector<8x256xf32>
    %49 = vector.broadcast %47 : vector<1x256xf32> to vector<8x256xf32>
    %50 = arith.mulf %48, %49 : vector<8x256xf32>
    %51 = vector.extract_strided_slice %44 {offsets = [0, 1], sizes = [8, 1], strides = [1, 1]} : vector<8x4xf32> to vector<8x1xf32>
    %52 = vector.extract_strided_slice %43 {offsets = [1, 0], sizes = [1, 256], strides = [1, 1]} : vector<8x256xf32> to vector<1x256xf32>
    %53 = vector.broadcast %51 : vector<8x1xf32> to vector<8x256xf32>
    %54 = vector.broadcast %52 : vector<1x256xf32> to vector<8x256xf32>
    %55 = arith.mulf %53, %54 : vector<8x256xf32>
    %56 = arith.addf %50, %55 : vector<8x256xf32>
    %57 = vector.extract_strided_slice %44 {offsets = [0, 2], sizes = [8, 1], strides = [1, 1]} : vector<8x4xf32> to vector<8x1xf32>
    %58 = vector.extract_strided_slice %43 {offsets = [2, 0], sizes = [1, 256], strides = [1, 1]} : vector<8x256xf32> to vector<1x256xf32>
    %59 = vector.broadcast %57 : vector<8x1xf32> to vector<8x256xf32>
    %60 = vector.broadcast %58 : vector<1x256xf32> to vector<8x256xf32>
    %61 = arith.mulf %59, %60 : vector<8x256xf32>
    %62 = arith.addf %56, %61 : vector<8x256xf32>
    %63 = vector.extract_strided_slice %44 {offsets = [0, 3], sizes = [8, 1], strides = [1, 1]} : vector<8x4xf32> to vector<8x1xf32>
    %64 = vector.extract_strided_slice %43 {offsets = [3, 0], sizes = [1, 256], strides = [1, 1]} : vector<8x256xf32> to vector<1x256xf32>
    %65 = vector.broadcast %63 : vector<8x1xf32> to vector<8x256xf32>
    %66 = vector.broadcast %64 : vector<1x256xf32> to vector<8x256xf32>
    %67 = arith.mulf %65, %66 : vector<8x256xf32>
    %68 = arith.addf %62, %67 : vector<8x256xf32>
    %69 = vector.broadcast %45 : vector<8x1xf32> to vector<8x256xf32>
    %70 = arith.addf %68, %69 : vector<8x256xf32>
    %cst = arith.constant 5.000000e-01 : f32
    %71 = vector.broadcast %cst : f32 to vector<8x256xf32>
    %72 = arith.mulf %71, %70 : vector<8x256xf32>
    %cst_24 = arith.constant 0.707106769 : f32
    %73 = vector.broadcast %cst_24 : f32 to vector<8x256xf32>
    %74 = arith.mulf %70, %73 : vector<8x256xf32>
    %75 = math.absf %74 : vector<8x256xf32>
    %cst_25 = arith.constant 0.327591091 : f32
    %76 = vector.broadcast %cst_25 : f32 to vector<8x256xf32>
    %77 = arith.mulf %76, %75 : vector<8x256xf32>
    %cst_26 = arith.constant 1.000000e+00 : f32
    %78 = vector.broadcast %cst_26 : f32 to vector<8x256xf32>
    %79 = arith.addf %78, %77 : vector<8x256xf32>
    %cst_27 = arith.constant 1.000000e+00 : f32
    %80 = vector.broadcast %cst_27 : f32 to vector<8x256xf32>
    %81 = arith.divf %80, %79 : vector<8x256xf32>
    %cst_28 = arith.constant 1.06140542 : f32
    %82 = vector.broadcast %cst_28 : f32 to vector<8x256xf32>
    %83 = arith.mulf %82, %81 : vector<8x256xf32>
    %cst_29 = arith.constant -1.45315206 : f32
    %84 = vector.broadcast %cst_29 : f32 to vector<8x256xf32>
    %85 = arith.addf %83, %84 : vector<8x256xf32>
    %86 = arith.mulf %85, %81 : vector<8x256xf32>
    %cst_30 = arith.constant 1.42141378 : f32
    %87 = vector.broadcast %cst_30 : f32 to vector<8x256xf32>
    %88 = arith.addf %86, %87 : vector<8x256xf32>
    %89 = arith.mulf %88, %81 : vector<8x256xf32>
    %cst_31 = arith.constant -0.284496725 : f32
    %90 = vector.broadcast %cst_31 : f32 to vector<8x256xf32>
    %91 = arith.addf %89, %90 : vector<8x256xf32>
    %92 = arith.mulf %91, %81 : vector<8x256xf32>
    %cst_32 = arith.constant 0.254829586 : f32
    %93 = vector.broadcast %cst_32 : f32 to vector<8x256xf32>
    %94 = arith.addf %92, %93 : vector<8x256xf32>
    %95 = arith.mulf %94, %81 : vector<8x256xf32>
    %cst_33 = arith.constant 0.000000e+00 : f32
    %96 = vector.broadcast %cst_33 : f32 to vector<8x256xf32>
    %97 = arith.subf %96, %75 : vector<8x256xf32>
    %98 = arith.mulf %97, %75 : vector<8x256xf32>
    %99 = math.exp %98 : vector<8x256xf32>
    %100 = arith.mulf %95, %99 : vector<8x256xf32>
    %cst_34 = arith.constant 1.000000e+00 : f32
    %101 = vector.broadcast %cst_34 : f32 to vector<8x256xf32>
    %102 = arith.subf %101, %100 : vector<8x256xf32>
    %cst_35 = arith.constant 0.000000e+00 : f32
    %103 = vector.broadcast %cst_35 : f32 to vector<8x256xf32>
    %104 = arith.cmpf olt, %74, %103 : vector<8x256xf32>
    %cst_36 = arith.constant 0.000000e+00 : f32
    %105 = vector.broadcast %cst_36 : f32 to vector<8x256xf32>
    %106 = arith.subf %105, %102 : vector<8x256xf32>
    %107 = arith.select %104, %106, %102 : vector<8x256xi1>, vector<8x256xf32>
    %cst_37 = arith.constant 1.000000e+00 : f32
    %108 = vector.broadcast %cst_37 : f32 to vector<8x256xf32>
    %109 = arith.addf %108, %107 : vector<8x256xf32>
    %110 = arith.mulf %72, %109 : vector<8x256xf32>
    %c0_38 = arith.constant 0 : index
    %c0_39 = arith.constant 0 : index
    %111 = vector.load %arg9[%c0_38, %c0_39] : memref<16x256xf32, #tpu.memory_space<vmem>>, vector<8x256xf32>
    tpu.vector_store %arg9[%c0_38, %c0_39], %110 {strides = array<i32>} : memref<16x256xf32, #tpu.memory_space<vmem>>, vector<8x256xf32>,
    %112 = vector.extract_strided_slice %44 {offsets = [0, 0], sizes = [8, 1], strides = [1, 1]} : vector<8x4xf32> to vector<8x1xf32>
    %113 = vector.extract_strided_slice %43 {offsets = [4, 0], sizes = [1, 256], strides = [1, 1]} : vector<8x256xf32> to vector<1x256xf32>
    %114 = vector.broadcast %112 : vector<8x1xf32> to vector<8x256xf32>
    %115 = vector.broadcast %113 : vector<1x256xf32> to vector<8x256xf32>
    %116 = arith.mulf %114, %115 : vector<8x256xf32>
    %117 = vector.extract_strided_slice %44 {offsets = [0, 1], sizes = [8, 1], strides = [1, 1]} : vector<8x4xf32> to vector<8x1xf32>
    %118 = vector.extract_strided_slice %43 {offsets = [5, 0], sizes = [1, 256], strides = [1, 1]} : vector<8x256xf32> to vector<1x256xf32>
    %119 = vector.broadcast %117 : vector<8x1xf32> to vector<8x256xf32>
    %120 = vector.broadcast %118 : vector<1x256xf32> to vector<8x256xf32>
    %121 = arith.mulf %119, %120 : vector<8x256xf32>
    %122 = arith.addf %116, %121 : vector<8x256xf32>
    %123 = vector.extract_strided_slice %44 {offsets = [0, 2], sizes = [8, 1], strides = [1, 1]} : vector<8x4xf32> to vector<8x1xf32>
    %124 = vector.extract_strided_slice %43 {offsets = [6, 0], sizes = [1, 256], strides = [1, 1]} : vector<8x256xf32> to vector<1x256xf32>
    %125 = vector.broadcast %123 : vector<8x1xf32> to vector<8x256xf32>
    %126 = vector.broadcast %124 : vector<1x256xf32> to vector<8x256xf32>
    %127 = arith.mulf %125, %126 : vector<8x256xf32>
    %128 = arith.addf %122, %127 : vector<8x256xf32>
    %129 = vector.extract_strided_slice %44 {offsets = [0, 3], sizes = [8, 1], strides = [1, 1]} : vector<8x4xf32> to vector<8x1xf32>
    %130 = vector.extract_strided_slice %43 {offsets = [7, 0], sizes = [1, 256], strides = [1, 1]} : vector<8x256xf32> to vector<1x256xf32>
    %131 = vector.broadcast %129 : vector<8x1xf32> to vector<8x256xf32>
    %132 = vector.broadcast %130 : vector<1x256xf32> to vector<8x256xf32>
    %133 = arith.mulf %131, %132 : vector<8x256xf32>
    %134 = arith.addf %128, %133 : vector<8x256xf32>
    %135 = vector.broadcast %45 : vector<8x1xf32> to vector<8x256xf32>
    %136 = arith.addf %134, %135 : vector<8x256xf32>
    %cst_40 = arith.constant 5.000000e-01 : f32
    %137 = vector.broadcast %cst_40 : f32 to vector<8x256xf32>
    %138 = arith.mulf %137, %136 : vector<8x256xf32>
    %cst_41 = arith.constant 0.707106769 : f32
    %139 = vector.broadcast %cst_41 : f32 to vector<8x256xf32>
    %140 = arith.mulf %136, %139 : vector<8x256xf32>
    %141 = math.absf %140 : vector<8x256xf32>
    %cst_42 = arith.constant 0.327591091 : f32
    %142 = vector.broadcast %cst_42 : f32 to vector<8x256xf32>
    %143 = arith.mulf %142, %141 : vector<8x256xf32>
    %cst_43 = arith.constant 1.000000e+00 : f32
    %144 = vector.broadcast %cst_43 : f32 to vector<8x256xf32>
    %145 = arith.addf %144, %143 : vector<8x256xf32>
    %cst_44 = arith.constant 1.000000e+00 : f32
    %146 = vector.broadcast %cst_44 : f32 to vector<8x256xf32>
    %147 = arith.divf %146, %145 : vector<8x256xf32>
    %cst_45 = arith.constant 1.06140542 : f32
    %148 = vector.broadcast %cst_45 : f32 to vector<8x256xf32>
    %149 = arith.mulf %148, %147 : vector<8x256xf32>
    %cst_46 = arith.constant -1.45315206 : f32
    %150 = vector.broadcast %cst_46 : f32 to vector<8x256xf32>
    %151 = arith.addf %149, %150 : vector<8x256xf32>
    %152 = arith.mulf %151, %147 : vector<8x256xf32>
    %cst_47 = arith.constant 1.42141378 : f32
    %153 = vector.broadcast %cst_47 : f32 to vector<8x256xf32>
    %154 = arith.addf %152, %153 : vector<8x256xf32>
    %155 = arith.mulf %154, %147 : vector<8x256xf32>
    %cst_48 = arith.constant -0.284496725 : f32
    %156 = vector.broadcast %cst_48 : f32 to vector<8x256xf32>
    %157 = arith.addf %155, %156 : vector<8x256xf32>
    %158 = arith.mulf %157, %147 : vector<8x256xf32>
    %cst_49 = arith.constant 0.254829586 : f32
    %159 = vector.broadcast %cst_49 : f32 to vector<8x256xf32>
    %160 = arith.addf %158, %159 : vector<8x256xf32>
    %161 = arith.mulf %160, %147 : vector<8x256xf32>
    %cst_50 = arith.constant 0.000000e+00 : f32
    %162 = vector.broadcast %cst_50 : f32 to vector<8x256xf32>
    %163 = arith.subf %162, %141 : vector<8x256xf32>
    %164 = arith.mulf %163, %141 : vector<8x256xf32>
    %165 = math.exp %164 : vector<8x256xf32>
    %166 = arith.mulf %161, %165 : vector<8x256xf32>
    %cst_51 = arith.constant 1.000000e+00 : f32
    %167 = vector.broadcast %cst_51 : f32 to vector<8x256xf32>
    %168 = arith.subf %167, %166 : vector<8x256xf32>
    %cst_52 = arith.constant 0.000000e+00 : f32
    %169 = vector.broadcast %cst_52 : f32 to vector<8x256xf32>
    %170 = arith.cmpf olt, %140, %169 : vector<8x256xf32>
    %cst_53 = arith.constant 0.000000e+00 : f32
    %171 = vector.broadcast %cst_53 : f32 to vector<8x256xf32>
    %172 = arith.subf %171, %168 : vector<8x256xf32>
    %173 = arith.select %170, %172, %168 : vector<8x256xi1>, vector<8x256xf32>
    %cst_54 = arith.constant 1.000000e+00 : f32
    %174 = vector.broadcast %cst_54 : f32 to vector<8x256xf32>
    %175 = arith.addf %174, %173 : vector<8x256xf32>
    %176 = arith.mulf %138, %175 : vector<8x256xf32>
    %c8_55 = arith.constant 8 : index
    %c0_56 = arith.constant 0 : index
    %177 = vector.load %arg9[%c8_55, %c0_56] : memref<16x256xf32, #tpu.memory_space<vmem>>, vector<8x256xf32>
    tpu.vector_store %arg9[%c8_55, %c0_56], %176 {strides = array<i32>} : memref<16x256xf32, #tpu.memory_space<vmem>>, vector<8x256xf32>,
    %c0_57 = arith.constant 0 : index
    %c0_58 = arith.constant 0 : index
    %178 = vector.load %arg9[%c0_57, %c0_58] : memref<16x256xf32, #tpu.memory_space<vmem>>, vector<16x256xf32>
    %c4_59 = arith.constant 4 : index
    %c0_60 = arith.constant 0 : index
    %c0_61 = arith.constant 0 : index
    %179 = vector.load %arg5[%c4_59, %c0_60, %c0_61] : memref<9x16x256xf32, #tpu.memory_space<vmem>>, vector<1x16x256xf32>
    %180 = vector.shape_cast %179 : vector<1x16x256xf32> to vector<16x256xf32>
    %181 = arith.mulf %180, %178 : vector<16x256xf32>
    %c0_62 = arith.constant 0 : index
    %c0_63 = arith.constant 0 : index
    %c0_64 = arith.constant 0 : index
    %182 = vector.load %arg5[%c0_62, %c0_63, %c0_64] : memref<9x16x256xf32, #tpu.memory_space<vmem>>, vector<1x16x256xf32>
    %183 = vector.shape_cast %182 : vector<1x16x256xf32> to vector<16x256xf32>
    %c17_i32_65 = arith.constant 17 : i32
    %184 = tpu.dynamic_rotate %178 by %c17_i32_65 dim 1 : vector<16x256xf32>, i32 -> vector<16x256xf32>
    %185 = arith.mulf %183, %184 : vector<16x256xf32>
    %186 = arith.addf %181, %185 : vector<16x256xf32>
    %c1_66 = arith.constant 1 : index
    %c0_67 = arith.constant 0 : index
    %c0_68 = arith.constant 0 : index
    %187 = vector.load %arg5[%c1_66, %c0_67, %c0_68] : memref<9x16x256xf32, #tpu.memory_space<vmem>>, vector<1x16x256xf32>
    %188 = vector.shape_cast %187 : vector<1x16x256xf32> to vector<16x256xf32>
    %c16_i32_69 = arith.constant 16 : i32
    %189 = tpu.dynamic_rotate %178 by %c16_i32_69 dim 1 : vector<16x256xf32>, i32 -> vector<16x256xf32>
    %190 = arith.mulf %188, %189 : vector<16x256xf32>
    %191 = arith.addf %186, %190 : vector<16x256xf32>
    %c2_70 = arith.constant 2 : index
    %c0_71 = arith.constant 0 : index
    %c0_72 = arith.constant 0 : index
    %192 = vector.load %arg5[%c2_70, %c0_71, %c0_72] : memref<9x16x256xf32, #tpu.memory_space<vmem>>, vector<1x16x256xf32>
    %193 = vector.shape_cast %192 : vector<1x16x256xf32> to vector<16x256xf32>
    %c15_i32_73 = arith.constant 15 : i32
    %194 = tpu.dynamic_rotate %178 by %c15_i32_73 dim 1 : vector<16x256xf32>, i32 -> vector<16x256xf32>
    %195 = arith.mulf %193, %194 : vector<16x256xf32>
    %196 = arith.addf %191, %195 : vector<16x256xf32>
    %c3_74 = arith.constant 3 : index
    %c0_75 = arith.constant 0 : index
    %c0_76 = arith.constant 0 : index
    %197 = vector.load %arg5[%c3_74, %c0_75, %c0_76] : memref<9x16x256xf32, #tpu.memory_space<vmem>>, vector<1x16x256xf32>
    %198 = vector.shape_cast %197 : vector<1x16x256xf32> to vector<16x256xf32>
    %c1_i32_77 = arith.constant 1 : i32
    %199 = tpu.dynamic_rotate %178 by %c1_i32_77 dim 1 : vector<16x256xf32>, i32 -> vector<16x256xf32>
    %200 = arith.mulf %198, %199 : vector<16x256xf32>
    %201 = arith.addf %196, %200 : vector<16x256xf32>
    %c5_78 = arith.constant 5 : index
    %c0_79 = arith.constant 0 : index
    %c0_80 = arith.constant 0 : index
    %202 = vector.load %arg5[%c5_78, %c0_79, %c0_80] : memref<9x16x256xf32, #tpu.memory_space<vmem>>, vector<1x16x256xf32>
    %203 = vector.shape_cast %202 : vector<1x16x256xf32> to vector<16x256xf32>
    %c255_i32_81 = arith.constant 255 : i32
    %204 = tpu.dynamic_rotate %178 by %c255_i32_81 dim 1 : vector<16x256xf32>, i32 -> vector<16x256xf32>
    %205 = arith.mulf %203, %204 : vector<16x256xf32>
    %206 = arith.addf %201, %205 : vector<16x256xf32>
    %c6_82 = arith.constant 6 : index
    %c0_83 = arith.constant 0 : index
    %c0_84 = arith.constant 0 : index
    %207 = vector.load %arg5[%c6_82, %c0_83, %c0_84] : memref<9x16x256xf32, #tpu.memory_space<vmem>>, vector<1x16x256xf32>
    %208 = vector.shape_cast %207 : vector<1x16x256xf32> to vector<16x256xf32>
    %c241_i32_85 = arith.constant 241 : i32
    %209 = tpu.dynamic_rotate %178 by %c241_i32_85 dim 1 : vector<16x256xf32>, i32 -> vector<16x256xf32>
    %210 = arith.mulf %208, %209 : vector<16x256xf32>
    %211 = arith.addf %206, %210 : vector<16x256xf32>
    %c7_86 = arith.constant 7 : index
    %c0_87 = arith.constant 0 : index
    %c0_88 = arith.constant 0 : index
    %212 = vector.load %arg5[%c7_86, %c0_87, %c0_88] : memref<9x16x256xf32, #tpu.memory_space<vmem>>, vector<1x16x256xf32>
    %213 = vector.shape_cast %212 : vector<1x16x256xf32> to vector<16x256xf32>
    %c240_i32_89 = arith.constant 240 : i32
    %214 = tpu.dynamic_rotate %178 by %c240_i32_89 dim 1 : vector<16x256xf32>, i32 -> vector<16x256xf32>
    %215 = arith.mulf %213, %214 : vector<16x256xf32>
    %216 = arith.addf %211, %215 : vector<16x256xf32>
    %c8_90 = arith.constant 8 : index
    %c0_91 = arith.constant 0 : index
    %c0_92 = arith.constant 0 : index
    %217 = vector.load %arg5[%c8_90, %c0_91, %c0_92] : memref<9x16x256xf32, #tpu.memory_space<vmem>>, vector<1x16x256xf32>
    %218 = vector.shape_cast %217 : vector<1x16x256xf32> to vector<16x256xf32>
    %c239_i32_93 = arith.constant 239 : i32
    %219 = tpu.dynamic_rotate %178 by %c239_i32_93 dim 1 : vector<16x256xf32>, i32 -> vector<16x256xf32>
    %220 = arith.mulf %218, %219 : vector<16x256xf32>
    %221 = arith.addf %216, %220 : vector<16x256xf32>
    %c0_94 = arith.constant 0 : index
    %c0_95 = arith.constant 0 : index
    %222 = vector.load %arg6[%c0_94, %c0_95] : memref<4x8xf32, #tpu.memory_space<vmem>>, vector<4x8xf32>
    %c0_96 = arith.constant 0 : index
    %c0_97 = arith.constant 0 : index
    %223 = vector.load %arg7[%c0_96, %c0_97] : memref<4x1xf32, #tpu.memory_space<vmem>>, vector<4x1xf32>
    %224 = vector.extract_strided_slice %222 {offsets = [0, 0], sizes = [4, 1], strides = [1, 1]} : vector<4x8xf32> to vector<4x1xf32>
    %225 = vector.extract_strided_slice %221 {offsets = [0, 0], sizes = [1, 256], strides = [1, 1]} : vector<16x256xf32> to vector<1x256xf32>
    %226 = vector.broadcast %224 : vector<4x1xf32> to vector<4x256xf32>
    %227 = vector.broadcast %225 : vector<1x256xf32> to vector<4x256xf32>
    %228 = arith.mulf %226, %227 : vector<4x256xf32>
    %229 = vector.extract_strided_slice %222 {offsets = [0, 1], sizes = [4, 1], strides = [1, 1]} : vector<4x8xf32> to vector<4x1xf32>
    %230 = vector.extract_strided_slice %221 {offsets = [1, 0], sizes = [1, 256], strides = [1, 1]} : vector<16x256xf32> to vector<1x256xf32>
    %231 = vector.broadcast %229 : vector<4x1xf32> to vector<4x256xf32>
    %232 = vector.broadcast %230 : vector<1x256xf32> to vector<4x256xf32>
    %233 = arith.mulf %231, %232 : vector<4x256xf32>
    %234 = arith.addf %228, %233 : vector<4x256xf32>
    %235 = vector.extract_strided_slice %222 {offsets = [0, 2], sizes = [4, 1], strides = [1, 1]} : vector<4x8xf32> to vector<4x1xf32>
    %236 = vector.extract_strided_slice %221 {offsets = [2, 0], sizes = [1, 256], strides = [1, 1]} : vector<16x256xf32> to vector<1x256xf32>
    %237 = vector.broadcast %235 : vector<4x1xf32> to vector<4x256xf32>
    %238 = vector.broadcast %236 : vector<1x256xf32> to vector<4x256xf32>
    %239 = arith.mulf %237, %238 : vector<4x256xf32>
    %240 = arith.addf %234, %239 : vector<4x256xf32>
    %241 = vector.extract_strided_slice %222 {offsets = [0, 3], sizes = [4, 1], strides = [1, 1]} : vector<4x8xf32> to vector<4x1xf32>
    %242 = vector.extract_strided_slice %221 {offsets = [3, 0], sizes = [1, 256], strides = [1, 1]} : vector<16x256xf32> to vector<1x256xf32>
    %243 = vector.broadcast %241 : vector<4x1xf32> to vector<4x256xf32>
    %244 = vector.broadcast %242 : vector<1x256xf32> to vector<4x256xf32>
    %245 = arith.mulf %243, %244 : vector<4x256xf32>
    %246 = arith.addf %240, %245 : vector<4x256xf32>
    %247 = vector.extract_strided_slice %222 {offsets = [0, 4], sizes = [4, 1], strides = [1, 1]} : vector<4x8xf32> to vector<4x1xf32>
    %248 = vector.extract_strided_slice %221 {offsets = [4, 0], sizes = [1, 256], strides = [1, 1]} : vector<16x256xf32> to vector<1x256xf32>
    %249 = vector.broadcast %247 : vector<4x1xf32> to vector<4x256xf32>
    %250 = vector.broadcast %248 : vector<1x256xf32> to vector<4x256xf32>
    %251 = arith.mulf %249, %250 : vector<4x256xf32>
    %252 = arith.addf %246, %251 : vector<4x256xf32>
    %253 = vector.extract_strided_slice %222 {offsets = [0, 5], sizes = [4, 1], strides = [1, 1]} : vector<4x8xf32> to vector<4x1xf32>
    %254 = vector.extract_strided_slice %221 {offsets = [5, 0], sizes = [1, 256], strides = [1, 1]} : vector<16x256xf32> to vector<1x256xf32>
    %255 = vector.broadcast %253 : vector<4x1xf32> to vector<4x256xf32>
    %256 = vector.broadcast %254 : vector<1x256xf32> to vector<4x256xf32>
    %257 = arith.mulf %255, %256 : vector<4x256xf32>
    %258 = arith.addf %252, %257 : vector<4x256xf32>
    %259 = vector.extract_strided_slice %222 {offsets = [0, 6], sizes = [4, 1], strides = [1, 1]} : vector<4x8xf32> to vector<4x1xf32>
    %260 = vector.extract_strided_slice %221 {offsets = [6, 0], sizes = [1, 256], strides = [1, 1]} : vector<16x256xf32> to vector<1x256xf32>
    %261 = vector.broadcast %259 : vector<4x1xf32> to vector<4x256xf32>
    %262 = vector.broadcast %260 : vector<1x256xf32> to vector<4x256xf32>
    %263 = arith.mulf %261, %262 : vector<4x256xf32>
    %264 = arith.addf %258, %263 : vector<4x256xf32>
    %265 = vector.extract_strided_slice %222 {offsets = [0, 7], sizes = [4, 1], strides = [1, 1]} : vector<4x8xf32> to vector<4x1xf32>
    %266 = vector.extract_strided_slice %221 {offsets = [7, 0], sizes = [1, 256], strides = [1, 1]} : vector<16x256xf32> to vector<1x256xf32>
    %267 = vector.broadcast %265 : vector<4x1xf32> to vector<4x256xf32>
    %268 = vector.broadcast %266 : vector<1x256xf32> to vector<4x256xf32>
    %269 = arith.mulf %267, %268 : vector<4x256xf32>
    %270 = arith.addf %264, %269 : vector<4x256xf32>
    %271 = vector.broadcast %223 : vector<4x1xf32> to vector<4x256xf32>
    %272 = arith.addf %270, %271 : vector<4x256xf32>
    %c0_98 = arith.constant 0 : index
    %c0_99 = arith.constant 0 : index
    %273 = vector.load %arg8[%c0_98, %c0_99] : memref<8x256xf32, #tpu.memory_space<vmem>>, vector<4x256xf32>
    tpu.vector_store %arg8[%c0_98, %c0_99], %272 {strides = array<i32>} : memref<8x256xf32, #tpu.memory_space<vmem>>, vector<4x256xf32>,
    %274 = vector.extract_strided_slice %222 {offsets = [0, 0], sizes = [4, 1], strides = [1, 1]} : vector<4x8xf32> to vector<4x1xf32>
    %275 = vector.extract_strided_slice %221 {offsets = [8, 0], sizes = [1, 256], strides = [1, 1]} : vector<16x256xf32> to vector<1x256xf32>
    %276 = vector.broadcast %274 : vector<4x1xf32> to vector<4x256xf32>
    %277 = vector.broadcast %275 : vector<1x256xf32> to vector<4x256xf32>
    %278 = arith.mulf %276, %277 : vector<4x256xf32>
    %279 = vector.extract_strided_slice %222 {offsets = [0, 1], sizes = [4, 1], strides = [1, 1]} : vector<4x8xf32> to vector<4x1xf32>
    %280 = vector.extract_strided_slice %221 {offsets = [9, 0], sizes = [1, 256], strides = [1, 1]} : vector<16x256xf32> to vector<1x256xf32>
    %281 = vector.broadcast %279 : vector<4x1xf32> to vector<4x256xf32>
    %282 = vector.broadcast %280 : vector<1x256xf32> to vector<4x256xf32>
    %283 = arith.mulf %281, %282 : vector<4x256xf32>
    %284 = arith.addf %278, %283 : vector<4x256xf32>
    %285 = vector.extract_strided_slice %222 {offsets = [0, 2], sizes = [4, 1], strides = [1, 1]} : vector<4x8xf32> to vector<4x1xf32>
    %286 = vector.extract_strided_slice %221 {offsets = [10, 0], sizes = [1, 256], strides = [1, 1]} : vector<16x256xf32> to vector<1x256xf32>
    %287 = vector.broadcast %285 : vector<4x1xf32> to vector<4x256xf32>
    %288 = vector.broadcast %286 : vector<1x256xf32> to vector<4x256xf32>
    %289 = arith.mulf %287, %288 : vector<4x256xf32>
    %290 = arith.addf %284, %289 : vector<4x256xf32>
    %291 = vector.extract_strided_slice %222 {offsets = [0, 3], sizes = [4, 1], strides = [1, 1]} : vector<4x8xf32> to vector<4x1xf32>
    %292 = vector.extract_strided_slice %221 {offsets = [11, 0], sizes = [1, 256], strides = [1, 1]} : vector<16x256xf32> to vector<1x256xf32>
    %293 = vector.broadcast %291 : vector<4x1xf32> to vector<4x256xf32>
    %294 = vector.broadcast %292 : vector<1x256xf32> to vector<4x256xf32>
    %295 = arith.mulf %293, %294 : vector<4x256xf32>
    %296 = arith.addf %290, %295 : vector<4x256xf32>
    %297 = vector.extract_strided_slice %222 {offsets = [0, 4], sizes = [4, 1], strides = [1, 1]} : vector<4x8xf32> to vector<4x1xf32>
    %298 = vector.extract_strided_slice %221 {offsets = [12, 0], sizes = [1, 256], strides = [1, 1]} : vector<16x256xf32> to vector<1x256xf32>
    %299 = vector.broadcast %297 : vector<4x1xf32> to vector<4x256xf32>
    %300 = vector.broadcast %298 : vector<1x256xf32> to vector<4x256xf32>
    %301 = arith.mulf %299, %300 : vector<4x256xf32>
    %302 = arith.addf %296, %301 : vector<4x256xf32>
    %303 = vector.extract_strided_slice %222 {offsets = [0, 5], sizes = [4, 1], strides = [1, 1]} : vector<4x8xf32> to vector<4x1xf32>
    %304 = vector.extract_strided_slice %221 {offsets = [13, 0], sizes = [1, 256], strides = [1, 1]} : vector<16x256xf32> to vector<1x256xf32>
    %305 = vector.broadcast %303 : vector<4x1xf32> to vector<4x256xf32>
    %306 = vector.broadcast %304 : vector<1x256xf32> to vector<4x256xf32>
    %307 = arith.mulf %305, %306 : vector<4x256xf32>
    %308 = arith.addf %302, %307 : vector<4x256xf32>
    %309 = vector.extract_strided_slice %222 {offsets = [0, 6], sizes = [4, 1], strides = [1, 1]} : vector<4x8xf32> to vector<4x1xf32>
    %310 = vector.extract_strided_slice %221 {offsets = [14, 0], sizes = [1, 256], strides = [1, 1]} : vector<16x256xf32> to vector<1x256xf32>
    %311 = vector.broadcast %309 : vector<4x1xf32> to vector<4x256xf32>
    %312 = vector.broadcast %310 : vector<1x256xf32> to vector<4x256xf32>
    %313 = arith.mulf %311, %312 : vector<4x256xf32>
    %314 = arith.addf %308, %313 : vector<4x256xf32>
    %315 = vector.extract_strided_slice %222 {offsets = [0, 7], sizes = [4, 1], strides = [1, 1]} : vector<4x8xf32> to vector<4x1xf32>
    %316 = vector.extract_strided_slice %221 {offsets = [15, 0], sizes = [1, 256], strides = [1, 1]} : vector<16x256xf32> to vector<1x256xf32>
    %317 = vector.broadcast %315 : vector<4x1xf32> to vector<4x256xf32>
    %318 = vector.broadcast %316 : vector<1x256xf32> to vector<4x256xf32>
    %319 = arith.mulf %317, %318 : vector<4x256xf32>
    %320 = arith.addf %314, %319 : vector<4x256xf32>
    %321 = vector.broadcast %223 : vector<4x1xf32> to vector<4x256xf32>
    %322 = arith.addf %320, %321 : vector<4x256xf32>
    %c4_100 = arith.constant 4 : index
    %c0_101 = arith.constant 0 : index
    %323 = vector.load %arg8[%c4_100, %c0_101] : memref<8x256xf32, #tpu.memory_space<vmem>>, vector<4x256xf32>
    tpu.vector_store %arg8[%c4_100, %c0_101], %322 {strides = array<i32>} : memref<8x256xf32, #tpu.memory_space<vmem>>, vector<4x256xf32>,
    return
  }
  func.func @transform_0(%arg0: i32) -> (i32, i32) {
    %c0_i32 = arith.constant 0 : i32
    %c0_i32_0 = arith.constant 0 : i32
    return %arg0, %c0_i32 : i32, i32
  }
  func.func @transform_1(%arg0: i32) -> (i32, i32, i32) {
    %c0_i32 = arith.constant 0 : i32
    %c0_i32_0 = arith.constant 0 : i32
    %c0_i32_1 = arith.constant 0 : i32
    %c0_i32_2 = arith.constant 0 : i32
    return %c0_i32, %c0_i32_0, %c0_i32_1 : i32, i32, i32
  }
  func.func @transform_2(%arg0: i32) -> (i32, i32) {
    %c0_i32 = arith.constant 0 : i32
    %c0_i32_0 = arith.constant 0 : i32
    %c0_i32_1 = arith.constant 0 : i32
    return %c0_i32, %c0_i32_0 : i32, i32
  }
  func.func @transform_3(%arg0: i32) -> (i32, i32) {
    %c0_i32 = arith.constant 0 : i32
    %c0_i32_0 = arith.constant 0 : i32
    %c0_i32_1 = arith.constant 0 : i32
    return %c0_i32, %c0_i32_0 : i32, i32
  }
  func.func @transform_4(%arg0: i32) -> (i32, i32, i32) {
    %c0_i32 = arith.constant 0 : i32
    %c0_i32_0 = arith.constant 0 : i32
    %c0_i32_1 = arith.constant 0 : i32
    %c0_i32_2 = arith.constant 0 : i32
    return %c0_i32, %c0_i32_0, %c0_i32_1 : i32, i32, i32
  }
  func.func @transform_5(%arg0: i32) -> (i32, i32) {
    %c0_i32 = arith.constant 0 : i32
    %c0_i32_0 = arith.constant 0 : i32
    %c0_i32_1 = arith.constant 0 : i32
    return %c0_i32, %c0_i32_0 : i32, i32
  }
  func.func @transform_6(%arg0: i32) -> (i32, i32) {
    %c0_i32 = arith.constant 0 : i32
    %c0_i32_0 = arith.constant 0 : i32
    %c0_i32_1 = arith.constant 0 : i32
    return %c0_i32, %c0_i32_0 : i32, i32
  }
  func.func @transform_7(%arg0: i32) -> (i32, i32) {
    %c0_i32 = arith.constant 0 : i32
    %c0_i32_0 = arith.constant 0 : i32
    return %arg0, %c0_i32 : i32, i32
  }
}

</mosaic_0001>

<llo_original>
// kernel: tpu_custom_call.1
$region0: #{tpu_custom_call.1}
  #allocation0 [shape = 'u32[]', space=smem, size = 0x4, offset = 0x4, fixed_abs, tag = 'smem constant byte address 0x4 - core index']
  #allocation1 [shape = 'u32[72,128]{1,0:T(1,128)}', space=vmem, size = 0x9000, scoped, tag = 'internal scratch']
  #allocation2 [shape = 'f32[16,256]{1,0:T(8,128)}', space=vmem, size = 0x4000, scoped, tag = 'scratch operand']
  %s0 = inlined_call_operand.vmem [shape: f32[8,256], index: 0, kind: input, shape index: {}]
  %s1 = inlined_call_operand.hbm [shape: f32[9,8,256], index: 1, kind: input, shape index: {}]
  %s2 = inlined_call_operand.vmem [shape: f32[8,4], index: 2, kind: input, shape index: {}]
  %s3 = inlined_call_operand.vmem [shape: f32[8,1], index: 3, kind: input, shape index: {}]
  %s4 = inlined_call_operand.hbm [shape: f32[9,16,256], index: 4, kind: input, shape index: {}]
  %s5 = inlined_call_operand.vmem [shape: f32[4,8], index: 5, kind: input, shape index: {}]
  %s6 = inlined_call_operand.vmem [shape: f32[4,1], index: 6, kind: input, shape index: {}]
  %s7 = inlined_call_operand.hbm [shape: f32[8,256], index: 7, kind: output, shape index: {}]
  %s8 = sld [smem:[#allocation0]]
  $region46: #{tpu_custom_call.1} parent=0
    _
  %s10 = ssub.s32 1, %s8
  %s11 = scalar_select 0, %s10, %s8
  $region1: #{tpu_custom_call.1} parent=0
    #allocation3 [shape = 'u8[73728]{0}', space=vmem, size = 0x12000, scoped, tag = 'input window, operand 1, single buffered']
    #allocation4 [shape = 's32[1]{0}', space=sflag, size = 0x4, scoped, tag = 'scoped memory for tpu_custom_call.1']
    #allocation5 [shape = 's32[1]{0}', space=sflag, size = 0x4, scoped, tag = 'scoped memory for tpu_custom_call.1']
    #allocation6 [shape = 'u8[147456]{0}', space=vmem, size = 0x24000, scoped, tag = 'input window, operand 4, single buffered']
    #allocation7 [shape = 's32[1]{0}', space=sflag, size = 0x4, scoped, tag = 'scoped memory for tpu_custom_call.1']
    #allocation8 [shape = 'u8[8192]{0}', space=vmem, size = 0x2000, scoped, tag = 'output window, operand 0, single buffered']
    %12 = vsyncpa [#allocation4], 0
    %13 = vsyncpa [#allocation7], 0
    %14 = vsyncpa [#allocation5], 0
    // Predicated region
    $region2: #{tpu_custom_call.1} parent=1 // pred_check
      _
    $region3: #{tpu_custom_call.1} parent=1 // pred_check_branch
      %16 = sbr.rel (0) target = $region5
    $region4: #{tpu_custom_call.1} parent=1 // pred_region
      _
    $region5: #{tpu_custom_call.1} parent=1 // pred_fallthru
      _
    // Predicated region
    $region6: #{tpu_custom_call.1} parent=1 // pred_check
      _
    $region7: #{tpu_custom_call.1} parent=1 // pred_check_branch
      %18 = sbr.rel (0) target = $region9
    $region8: #{tpu_custom_call.1} parent=1 // pred_region
      %20 = vsyncadd [#allocation4], 0
      %s21 = sshll.u32 %s1, 4
      %s22 = int_to_ptr.hbm [resolvable:$true] %s21
      %s23 = sshll.u32 [#allocation3], 4
      %s24 = int_to_ptr.vmem [resolvable:$true] %s23
      %29 = dma.hbm_to_vmem [thread:$0]  %s22, 2304, %s24, [#allocation4], 256, 256, 16
    $region9: #{tpu_custom_call.1} parent=1 // pred_fallthru
      _
    // Predicated region
    $region10: #{tpu_custom_call.1} parent=1 // pred_check
      _
    $region11: #{tpu_custom_call.1} parent=1 // pred_check_branch
      %31 = sbr.rel (0) target = $region13
    $region12: #{tpu_custom_call.1} parent=1 // pred_region
      _
    $region13: #{tpu_custom_call.1} parent=1 // pred_fallthru
      _
    // Predicated region
    $region14: #{tpu_custom_call.1} parent=1 // pred_check
      _
    $region15: #{tpu_custom_call.1} parent=1 // pred_check_branch
      %33 = sbr.rel (0) target = $region17
    $region16: #{tpu_custom_call.1} parent=1 // pred_region
      _
    $region17: #{tpu_custom_call.1} parent=1 // pred_fallthru
      _
    // Predicated region
    $region18: #{tpu_custom_call.1} parent=1 // pred_check
      _
    $region19: #{tpu_custom_call.1} parent=1 // pred_check_branch
      %35 = sbr.rel (0) target = $region21
    $region20: #{tpu_custom_call.1} parent=1 // pred_region
      %37 = vsyncadd [#allocation7], 0
      %s38 = sshll.u32 %s4, 4
      %s39 = int_to_ptr.hbm [resolvable:$true] %s38
      %s40 = sshll.u32 [#allocation6], 4
      %s41 = int_to_ptr.vmem [resolvable:$true] %s40
      %46 = dma.hbm_to_vmem [thread:$0]  %s39, 4608, %s41, [#allocation7], 256, 256, 16
    $region21: #{tpu_custom_call.1} parent=1 // pred_fallthru
      _
    // Predicated region
    $region22: #{tpu_custom_call.1} parent=1 // pred_check
      _
    $region23: #{tpu_custom_call.1} parent=1 // pred_check_branch
      %48 = sbr.rel (0) target = $region25
    $region24: #{tpu_custom_call.1} parent=1 // pred_region
      _
    $region25: #{tpu_custom_call.1} parent=1 // pred_fallthru
      _
    // Predicated region
    $region26: #{tpu_custom_call.1} parent=1 // pred_check
      _
    $region27: #{tpu_custom_call.1} parent=1 // pred_check_branch
      %50 = sbr.rel (0) target = $region29
    $region28: #{tpu_custom_call.1} parent=1 // pred_region
      _
    $region29: #{tpu_custom_call.1} parent=1 // pred_fallthru
      _
    // Predicated region
    $region30: #{tpu_custom_call.1} parent=1 // pred_check
      _
    $region31: #{tpu_custom_call.1} parent=1 // pred_check_branch
      %52 = sbr.rel (0) target = $region33
    $region32: #{tpu_custom_call.1} parent=1 // pred_region
      %54 = dma.done [#allocation4], 2304
    $region33: #{tpu_custom_call.1} parent=1 // pred_fallthru
      _
    // Predicated region
    $region34: #{tpu_custom_call.1} parent=1 // pred_check
      _
    $region35: #{tpu_custom_call.1} parent=1 // pred_check_branch
      %56 = sbr.rel (0) target = $region37
    $region36: #{tpu_custom_call.1} parent=1 // pred_region
      %58 = dma.done [#allocation7], 4608
    $region37: #{tpu_custom_call.1} parent=1 // pred_fallthru
      _
    %v59 = vld [vmem:[%s0] sm:$0xff]
    %v60 = vld [vmem:[%s0 + $0x8] sm:$0xff]
    %s61 = scalar_lea.vmem [#allocation3], 64
    %v62 = vld [vmem:[%s61] sm:$0xff]
    %v63 = vld [vmem:[%s61 + $0x8] sm:$0xff]
    %v64 = vmul.f32 %v62, %v59
    %v65 = vmul.f32 %v63, %v60
    %v66 = vld [vmem:[#allocation3] sm:$0xff]
    %v67 = vld [vmem:[#allocation3 + $0x8] sm:$0xff]
    %68 = vrot.lane.b32.xlu0 %v59, 17
    %v69 = vpop.permute.xlu0 %68
    %70 = vrot.lane.b32.xlu0 %v60, 17
    %v71 = vpop.permute.xlu0 %70
    %v72 = vlaneseq
    %v73 = vand.u32 %v72, 127
    %vm74 = vcmp.lt.s32.totalorder %v73, 17
    %v75 = vsel %vm74, %v69, %v71
    %v76 = vsel %vm74, %v71, %v69
    %v77 = vmul.f32 %v66, %v76
    %v78 = vmul.f32 %v67, %v75
    %v79 = vadd.f32 %v64, %v77
    %v80 = vadd.f32 %v65, %v78
    %s81 = scalar_lea.vmem [#allocation3], 16
    %v82 = vld [vmem:[%s81] sm:$0xff]
    %v83 = vld [vmem:[%s81 + $0x8] sm:$0xff]
    %84 = vrot.lane.b32.xlu0 %v59, 16
    %v85 = vpop.permute.xlu0 %84
    %86 = vrot.lane.b32.xlu0 %v60, 16
    %v87 = vpop.permute.xlu0 %86
    %vm88 = vcmp.lt.s32.totalorder %v73, 16
    %v89 = vsel %vm88, %v85, %v87
    %v90 = vsel %vm88, %v87, %v85
    %v91 = vmul.f32 %v82, %v90
    %v92 = vmul.f32 %v83, %v89
    %v93 = vadd.f32 %v79, %v91
    %v94 = vadd.f32 %v80, %v92
    %s95 = scalar_lea.vmem [#allocation3], 32
    %v96 = vld [vmem:[%s95] sm:$0xff]
    %v97 = vld [vmem:[%s95 + $0x8] sm:$0xff]
    %98 = vrot.lane.b32.xlu0 %v59, 15
    %v99 = vpop.permute.xlu0 %98
    %100 = vrot.lane.b32.xlu0 %v60, 15
    %v101 = vpop.permute.xlu0 %100
    %vm102 = vcmp.lt.s32.totalorder %v73, 15
    %v103 = vsel %vm102, %v99, %v101
    %v104 = vsel %vm102, %v101, %v99
    %v105 = vmul.f32 %v96, %v104
    %v106 = vmul.f32 %v97, %v103
    %v107 = vadd.f32 %v93, %v105
    %v108 = vadd.f32 %v94, %v106
    %s109 = scalar_lea.vmem [#allocation3], 48
    %v110 = vld [vmem:[%s109] sm:$0xff]
    %v111 = vld [vmem:[%s109 + $0x8] sm:$0xff]
    %112 = vrot.lane.b32.xlu0 %v59, 1
    %v113 = vpop.permute.xlu0 %112
    %114 = vrot.lane.b32.xlu0 %v60, 1
    %v115 = vpop.permute.xlu0 %114
    %vm116 = vcmp.lt.s32.totalorder %v73, 1
    %v117 = vsel %vm116, %v113, %v115
    %v118 = vsel %vm116, %v115, %v113
    %v119 = vmul.f32 %v110, %v118
    %v120 = vmul.f32 %v111, %v117
    %v121 = vadd.f32 %v107, %v119
    %v122 = vadd.f32 %v108, %v120
    %s123 = scalar_lea.vmem [#allocation3], 80
    %v124 = vld [vmem:[%s123] sm:$0xff]
    %v125 = vld [vmem:[%s123 + $0x8] sm:$0xff]
    %126 = vrot.lane.b32.xlu0 %v59, 127
    %v127 = vpop.permute.xlu0 %126
    %128 = vrot.lane.b32.xlu0 %v60, 127
    %v129 = vpop.permute.xlu0 %128
    %vm130 = vcmp.lt.s32.totalorder %v73, 127
    %v131 = vsel %vm130, %v127, %v129
    %v132 = vsel %vm130, %v129, %v127
    %v133 = vmul.f32 %v124, %v131
    %v134 = vmul.f32 %v125, %v132
    %v135 = vadd.f32 %v121, %v133
    %v136 = vadd.f32 %v122, %v134
    %s137 = scalar_lea.vmem [#allocation3], 96
    %v138 = vld [vmem:[%s137] sm:$0xff]
    %v139 = vld [vmem:[%s137 + $0x8] sm:$0xff]
    %140 = vrot.lane.b32.xlu0 %v59, 113
    %v141 = vpop.permute.xlu0 %140
    %142 = vrot.lane.b32.xlu0 %v60, 113
    %v143 = vpop.permute.xlu0 %142
    %vm144 = vcmp.lt.s32.totalorder %v73, 113
    %v145 = vsel %vm144, %v141, %v143
    %v146 = vsel %vm144, %v143, %v141
    %v147 = vmul.f32 %v138, %v145
    %v148 = vmul.f32 %v139, %v146
    %v149 = vadd.f32 %v135, %v147
    %v150 = vadd.f32 %v136, %v148
    %s151 = scalar_lea.vmem [#allocation3], 112
    %v152 = vld [vmem:[%s151] sm:$0xff]
    %v153 = vld [vmem:[%s151 + $0x8] sm:$0xff]
    %154 = vrot.lane.b32.xlu0 %v59, 112
    %v155 = vpop.permute.xlu0 %154
    %156 = vrot.lane.b32.xlu0 %v60, 112
    %v157 = vpop.permute.xlu0 %156
    %vm158 = vcmp.lt.s32.totalorder %v73, 112
    %v159 = vsel %vm158, %v155, %v157
    %v160 = vsel %vm158, %v157, %v155
    %v161 = vmul.f32 %v152, %v159
    %v162 = vmul.f32 %v153, %v160
    %v163 = vadd.f32 %v149, %v161
    %v164 = vadd.f32 %v150, %v162
    %s165 = scalar_lea.vmem [#allocation3], 128
    %v166 = vld [vmem:[%s165] sm:$0xff]
    %v167 = vld [vmem:[%s165 + $0x8] sm:$0xff]
    %168 = vrot.lane.b32.xlu0 %v59, 111
    %v169 = vpop.permute.xlu0 %168
    %170 = vrot.lane.b32.xlu0 %v60, 111
    %v171 = vpop.permute.xlu0 %170
    %vm172 = vcmp.lt.s32.totalorder %v73, 111
    %v173 = vsel %vm172, %v169, %v171
    %v174 = vsel %vm172, %v171, %v169
    %v175 = vmul.f32 %v166, %v173
    %v176 = vmul.f32 %v167, %v174
    %v177 = vadd.f32 %v163, %v175
    %v178 = vadd.f32 %v164, %v176
    %v179 = vld [vmem:[%s2] sm:$0xff]
    %v180 = vld [vmem:[%s3] sm:$0xff]
    %182 = vset.pattern.permute.xlu0 0
    %183 = vperm.xlu0 %182, %v179
    %v184 = vpop.permute.xlu0 %183
    %v186 = vperm.slane %v177, 0
    %v187 = vperm.slane %v178, 0
    %v188 = vmul.f32 %v184, %v186
    %v189 = vmul.f32 %v184, %v187
    %190 = vset.pattern.permute.xlu0 1
    %191 = vperm.xlu0 %190, %v179
    %v192 = vpop.permute.xlu0 %191
    %v194 = vperm.slane %v177, 1
    %v195 = vperm.slane %v178, 1
    %v196 = vmul.f32 %v192, %v194
    %v197 = vmul.f32 %v192, %v195
    %v198 = vadd.f32 %v188, %v196
    %v199 = vadd.f32 %v189, %v197
    %200 = vset.pattern.permute.xlu0 2
    %201 = vperm.xlu0 %200, %v179
    %v202 = vpop.permute.xlu0 %201
    %v204 = vperm.slane %v177, 2
    %v205 = vperm.slane %v178, 2
    %v206 = vmul.f32 %v202, %v204
    %v207 = vmul.f32 %v202, %v205
    %v208 = vadd.f32 %v198, %v206
    %v209 = vadd.f32 %v199, %v207
    %210 = vset.pattern.permute.xlu0 3
    %211 = vperm.xlu0 %210, %v179
    %v212 = vpop.permute.xlu0 %211
    %v214 = vperm.slane %v177, 3
    %v215 = vperm.slane %v178, 3
    %v216 = vmul.f32 %v212, %v214
    %v217 = vmul.f32 %v212, %v215
    %v218 = vadd.f32 %v208, %v216
    %v219 = vadd.f32 %v209, %v217
    %221 = vset.pattern.permute.xlu0 0
    %222 = vperm.xlu0 %221, %v180
    %v223 = vpop.permute.xlu0 %222
    %v225 = vadd.f32 %v218, %v223
    %v226 = vadd.f32 %v219, %v223
    %v227 = vmul.f32 %v225, 0.5
    %v228 = vmul.f32 %v226, 0.5
    %v229 = vmul.f32 %v225, 0.70710677
    %v230 = vmul.f32 %v226, 0.70710677
    %v231 = vand.u32 2147483647, %v229
    %v232 = vand.u32 2147483647, %v230
    %v233 = vmul.f32 %v231, 0.3275911
    %v234 = vmul.f32 %v232, 0.3275911
    %v235 = vadd.f32 %v233, 1.0
    %v236 = vadd.f32 %v234, 1.0
    %v237 = vrcp.pop %v235
    %v238 = vmul.f32 %v235, %v237
    %v239 = vsub.f32 1.0, %v238
    %v240 = vmul.f32 %v237, %v239
    %v241 = vadd.f32 %v237, %v240
    %vm242 = vweird.f32 %v235
    %vm243 = vweird.f32 %v237
    %vm244 = vmor %vm242, %vm243
    %v245 = vsel %vm244, %v237, %v241
    %v246 = vand.u32 2147483647, %v235
    %vm247 = vcmp.eq.f32.partialorder %v246, 8.507059e+37
    %v248 = vand.u32 %v235, 2147483648
    %v249 = vor.u32 1.1754944e-38, %v248
    %v250 = vsel %vm247, %v249, %v245
    %v251 = vmul.f32 1.0, %v250
    %v252 = vrcp.pop %v236
    %v253 = vmul.f32 %v236, %v252
    %v254 = vsub.f32 1.0, %v253
    %v255 = vmul.f32 %v252, %v254
    %v256 = vadd.f32 %v252, %v255
    %vm257 = vweird.f32 %v236
    %vm258 = vweird.f32 %v252
    %vm259 = vmor %vm257, %vm258
    %v260 = vsel %vm259, %v252, %v256
    %v261 = vand.u32 2147483647, %v236
    %vm262 = vcmp.eq.f32.partialorder %v261, 8.507059e+37
    %v263 = vand.u32 %v236, 2147483648
    %v264 = vor.u32 1.1754944e-38, %v263
    %v265 = vsel %vm262, %v264, %v260
    %v266 = vmul.f32 1.0, %v265
    %v267 = vmul.f32 %v251, 1.0614054
    %v268 = vmul.f32 %v266, 1.0614054
    %v269 = vadd.f32 %v267, -1.4531521
    %v270 = vadd.f32 %v268, -1.4531521
    %v271 = vmul.f32 %v269, %v251
    %v272 = vmul.f32 %v270, %v266
    %v273 = vadd.f32 %v271, 1.4214138
    %v274 = vadd.f32 %v272, 1.4214138
    %v275 = vmul.f32 %v273, %v251
    %v276 = vmul.f32 %v274, %v266
    %v277 = vadd.f32 %v275, -0.28449672
    %v278 = vadd.f32 %v276, -0.28449672
    %v279 = vmul.f32 %v277, %v251
    %v280 = vmul.f32 %v278, %v266
    %v281 = vadd.f32 %v279, 0.2548296
    %v282 = vadd.f32 %v280, 0.2548296
    %v283 = vmul.f32 %v281, %v251
    %v284 = vmul.f32 %v282, %v266
    %v285 = vsub.f32 0.0, %v231
    %v286 = vsub.f32 0.0, %v232
    %v287 = vmul.f32 %v285, %v231
    %v288 = vmul.f32 %v286, %v232
    %v289 = vmul.f32 %v287, 1.442695
    %v290 = vpow.pop %v289
    %v291 = vmul.f32 %v288, 1.442695
    %v292 = vpow.pop %v291
    %v293 = vmul.f32 %v283, %v290
    %v294 = vmul.f32 %v284, %v292
    %v295 = vsub.f32 1.0, %v293
    %v296 = vsub.f32 1.0, %v294
    %vm297 = vcmp.lt.f32.partialorder %v229, 0.0
    %vm298 = vcmp.lt.f32.partialorder %v230, 0.0
    %v299 = vsub.f32 0.0, %v295
    %v300 = vsub.f32 0.0, %v296
    %v301 = vsel %vm297, %v299, %v295
    %v302 = vsel %vm298, %v300, %v296
    %v303 = vadd.f32 %v301, 1.0
    %v304 = vadd.f32 %v302, 1.0
    %v305 = vmul.f32 %v227, %v303
    %v306 = vmul.f32 %v228, %v304
    %307 = vst [vmem:[#allocation2] sm:$0xff] %v305
    %308 = vst [vmem:[#allocation2 + $0x8] sm:$0xff] %v306
    %v309 = vperm.slane %v177, 4
    %v310 = vperm.slane %v178, 4
    %v311 = vmul.f32 %v184, %v309
    %v312 = vmul.f32 %v184, %v310
    %v313 = vperm.slane %v177, 5
    %v314 = vperm.slane %v178, 5
    %v315 = vmul.f32 %v192, %v313
    %v316 = vmul.f32 %v192, %v314
    %v317 = vadd.f32 %v311, %v315
    %v318 = vadd.f32 %v312, %v316
    %v319 = vperm.slane %v177, 6
    %v320 = vperm.slane %v178, 6
    %v321 = vmul.f32 %v202, %v319
    %v322 = vmul.f32 %v202, %v320
    %v323 = vadd.f32 %v317, %v321
    %v324 = vadd.f32 %v318, %v322
    %v325 = vperm.slane %v177, 7
    %v326 = vperm.slane %v178, 7
    %v327 = vmul.f32 %v212, %v325
    %v328 = vmul.f32 %v212, %v326
    %v329 = vadd.f32 %v323, %v327
    %v330 = vadd.f32 %v324, %v328
    %v331 = vadd.f32 %v329, %v223
    %v332 = vadd.f32 %v330, %v223
    %v333 = vmul.f32 %v331, 0.5
    %v334 = vmul.f32 %v332, 0.5
    %v335 = vmul.f32 %v331, 0.70710677
    %v336 = vmul.f32 %v332, 0.70710677
    %v337 = vand.u32 2147483647, %v335
    %v338 = vand.u32 2147483647, %v336
    %v339 = vmul.f32 %v337, 0.3275911
    %v340 = vmul.f32 %v338, 0.3275911
    %v341 = vadd.f32 %v339, 1.0
    %v342 = vadd.f32 %v340, 1.0
    %v343 = vrcp.pop %v341
    %v344 = vmul.f32 %v341, %v343
    %v345 = vsub.f32 1.0, %v344
    %v346 = vmul.f32 %v343, %v345
    %v347 = vadd.f32 %v343, %v346
    %vm348 = vweird.f32 %v341
    %vm349 = vweird.f32 %v343
    %vm350 = vmor %vm348, %vm349
    %v351 = vsel %vm350, %v343, %v347
    %v352 = vand.u32 2147483647, %v341
    %vm353 = vcmp.eq.f32.partialorder %v352, 8.507059e+37
    %v354 = vand.u32 %v341, 2147483648
    %v355 = vor.u32 1.1754944e-38, %v354
    %v356 = vsel %vm353, %v355, %v351
    %v357 = vmul.f32 1.0, %v356
    %v358 = vrcp.pop %v342
    %v359 = vmul.f32 %v342, %v358
    %v360 = vsub.f32 1.0, %v359
    %v361 = vmul.f32 %v358, %v360
    %v362 = vadd.f32 %v358, %v361
    %vm363 = vweird.f32 %v342
    %vm364 = vweird.f32 %v358
    %vm365 = vmor %vm363, %vm364
    %v366 = vsel %vm365, %v358, %v362
    %v367 = vand.u32 2147483647, %v342
    %vm368 = vcmp.eq.f32.partialorder %v367, 8.507059e+37
    %v369 = vand.u32 %v342, 2147483648
    %v370 = vor.u32 1.1754944e-38, %v369
    %v371 = vsel %vm368, %v370, %v366
    %v372 = vmul.f32 1.0, %v371
    %v373 = vmul.f32 %v357, 1.0614054
    %v374 = vmul.f32 %v372, 1.0614054
    %v375 = vadd.f32 %v373, -1.4531521
    %v376 = vadd.f32 %v374, -1.4531521
    %v377 = vmul.f32 %v375, %v357
    %v378 = vmul.f32 %v376, %v372
    %v379 = vadd.f32 %v377, 1.4214138
    %v380 = vadd.f32 %v378, 1.4214138
    %v381 = vmul.f32 %v379, %v357
    %v382 = vmul.f32 %v380, %v372
    %v383 = vadd.f32 %v381, -0.28449672
    %v384 = vadd.f32 %v382, -0.28449672
    %v385 = vmul.f32 %v383, %v357
    %v386 = vmul.f32 %v384, %v372
    %v387 = vadd.f32 %v385, 0.2548296
    %v388 = vadd.f32 %v386, 0.2548296
    %v389 = vmul.f32 %v387, %v357
    %v390 = vmul.f32 %v388, %v372
    %v391 = vsub.f32 0.0, %v337
    %v392 = vsub.f32 0.0, %v338
    %v393 = vmul.f32 %v391, %v337
    %v394 = vmul.f32 %v392, %v338
    %v395 = vmul.f32 %v393, 1.442695
    %v396 = vpow.pop %v395
    %v397 = vmul.f32 %v394, 1.442695
    %v398 = vpow.pop %v397
    %v399 = vmul.f32 %v389, %v396
    %v400 = vmul.f32 %v390, %v398
    %v401 = vsub.f32 1.0, %v399
    %v402 = vsub.f32 1.0, %v400
    %vm403 = vcmp.lt.f32.partialorder %v335, 0.0
    %vm404 = vcmp.lt.f32.partialorder %v336, 0.0
    %v405 = vsub.f32 0.0, %v401
    %v406 = vsub.f32 0.0, %v402
    %v407 = vsel %vm403, %v405, %v401
    %v408 = vsel %vm404, %v406, %v402
    %v409 = vadd.f32 %v407, 1.0
    %v410 = vadd.f32 %v408, 1.0
    %v411 = vmul.f32 %v333, %v409
    %v412 = vmul.f32 %v334, %v410
    %413 = vst [vmem:[#allocation2 + $0x10] sm:$0xff] %v411
    %414 = vst [vmem:[#allocation2 + $0x18] sm:$0xff] %v412
    %v415 = vld [vmem:[#allocation2] sm:$0xff]
    %v416 = vld [vmem:[#allocation2 + $0x8] sm:$0xff]
    %v417 = vld [vmem:[#allocation2 + $0x10] sm:$0xff]
    %v418 = vld [vmem:[#allocation2 + $0x18] sm:$0xff]
    %s419 = scalar_lea.vmem [#allocation6], 128
    %v420 = vld [vmem:[%s419] sm:$0xff]
    %v421 = vld [vmem:[%s419 + $0x8] sm:$0xff]
    %v422 = vld [vmem:[%s419 + $0x10] sm:$0xff]
    %v423 = vld [vmem:[%s419 + $0x18] sm:$0xff]
    %v424 = vmul.f32 %v420, %v415
    %v425 = vmul.f32 %v421, %v416
    %v426 = vmul.f32 %v422, %v417
    %v427 = vmul.f32 %v423, %v418
    %v428 = vld [vmem:[#allocation6] sm:$0xff]
    %v429 = vld [vmem:[#allocation6 + $0x8] sm:$0xff]
    %v430 = vld [vmem:[#allocation6 + $0x10] sm:$0xff]
    %v431 = vld [vmem:[#allocation6 + $0x18] sm:$0xff]
    %432 = vrot.lane.b32.xlu0 %v415, 17
    %v433 = vpop.permute.xlu0 %432
    %434 = vrot.lane.b32.xlu0 %v417, 17
    %v435 = vpop.permute.xlu0 %434
    %436 = vrot.lane.b32.xlu0 %v416, 17
    %v437 = vpop.permute.xlu0 %436
    %438 = vrot.lane.b32.xlu0 %v418, 17
    %v439 = vpop.permute.xlu0 %438
    %v440 = vsel %vm74, %v433, %v437
    %v441 = vsel %vm74, %v435, %v439
    %v442 = vsel %vm74, %v437, %v433
    %v443 = vsel %vm74, %v439, %v435
    %v444 = vmul.f32 %v428, %v442
    %v445 = vmul.f32 %v429, %v440
    %v446 = vmul.f32 %v430, %v443
    %v447 = vmul.f32 %v431, %v441
    %v448 = vadd.f32 %v424, %v444
    %v449 = vadd.f32 %v425, %v445
    %v450 = vadd.f32 %v426, %v446
    %v451 = vadd.f32 %v427, %v447
    %s452 = scalar_lea.vmem [#allocation6], 32
    %v453 = vld [vmem:[%s452] sm:$0xff]
    %v454 = vld [vmem:[%s452 + $0x8] sm:$0xff]
    %v455 = vld [vmem:[%s452 + $0x10] sm:$0xff]
    %v456 = vld [vmem:[%s452 + $0x18] sm:$0xff]
    %457 = vrot.lane.b32.xlu0 %v415, 16
    %v458 = vpop.permute.xlu0 %457
    %459 = vrot.lane.b32.xlu0 %v417, 16
    %v460 = vpop.permute.xlu0 %459
    %461 = vrot.lane.b32.xlu0 %v416, 16
    %v462 = vpop.permute.xlu0 %461
    %463 = vrot.lane.b32.xlu0 %v418, 16
    %v464 = vpop.permute.xlu0 %463
    %v465 = vsel %vm88, %v458, %v462
    %v466 = vsel %vm88, %v460, %v464
    %v467 = vsel %vm88, %v462, %v458
    %v468 = vsel %vm88, %v464, %v460
    %v469 = vmul.f32 %v453, %v467
    %v470 = vmul.f32 %v454, %v465
    %v471 = vmul.f32 %v455, %v468
    %v472 = vmul.f32 %v456, %v466
    %v473 = vadd.f32 %v448, %v469
    %v474 = vadd.f32 %v449, %v470
    %v475 = vadd.f32 %v450, %v471
    %v476 = vadd.f32 %v451, %v472
    %s477 = scalar_lea.vmem [#allocation6], 64
    %v478 = vld [vmem:[%s477] sm:$0xff]
    %v479 = vld [vmem:[%s477 + $0x8] sm:$0xff]
    %v480 = vld [vmem:[%s477 + $0x10] sm:$0xff]
    %v481 = vld [vmem:[%s477 + $0x18] sm:$0xff]
    %482 = vrot.lane.b32.xlu0 %v415, 15
    %v483 = vpop.permute.xlu0 %482
    %484 = vrot.lane.b32.xlu0 %v417, 15
    %v485 = vpop.permute.xlu0 %484
    %486 = vrot.lane.b32.xlu0 %v416, 15
    %v487 = vpop.permute.xlu0 %486
    %488 = vrot.lane.b32.xlu0 %v418, 15
    %v489 = vpop.permute.xlu0 %488
    %v490 = vsel %vm102, %v483, %v487
    %v491 = vsel %vm102, %v485, %v489
    %v492 = vsel %vm102, %v487, %v483
    %v493 = vsel %vm102, %v489, %v485
    %v494 = vmul.f32 %v478, %v492
    %v495 = vmul.f32 %v479, %v490
    %v496 = vmul.f32 %v480, %v493
    %v497 = vmul.f32 %v481, %v491
    %v498 = vadd.f32 %v473, %v494
    %v499 = vadd.f32 %v474, %v495
    %v500 = vadd.f32 %v475, %v496
    %v501 = vadd.f32 %v476, %v497
    %s502 = scalar_lea.vmem [#allocation6], 96
    %v503 = vld [vmem:[%s502] sm:$0xff]
    %v504 = vld [vmem:[%s502 + $0x8] sm:$0xff]
    %v505 = vld [vmem:[%s502 + $0x10] sm:$0xff]
    %v506 = vld [vmem:[%s502 + $0x18] sm:$0xff]
    %507 = vrot.lane.b32.xlu0 %v415, 1
    %v508 = vpop.permute.xlu0 %507
    %509 = vrot.lane.b32.xlu0 %v417, 1
    %v510 = vpop.permute.xlu0 %509
    %511 = vrot.lane.b32.xlu0 %v416, 1
    %v512 = vpop.permute.xlu0 %511
    %513 = vrot.lane.b32.xlu0 %v418, 1
    %v514 = vpop.permute.xlu0 %513
    %v515 = vsel %vm116, %v508, %v512
    %v516 = vsel %vm116, %v510, %v514
    %v517 = vsel %vm116, %v512, %v508
    %v518 = vsel %vm116, %v514, %v510
    %v519 = vmul.f32 %v503, %v517
    %v520 = vmul.f32 %v504, %v515
    %v521 = vmul.f32 %v505, %v518
    %v522 = vmul.f32 %v506, %v516
    %v523 = vadd.f32 %v498, %v519
    %v524 = vadd.f32 %v499, %v520
    %v525 = vadd.f32 %v500, %v521
    %v526 = vadd.f32 %v501, %v522
    %s527 = scalar_lea.vmem [#allocation6], 160
    %v528 = vld [vmem:[%s527] sm:$0xff]
    %v529 = vld [vmem:[%s527 + $0x8] sm:$0xff]
    %v530 = vld [vmem:[%s527 + $0x10] sm:$0xff]
    %v531 = vld [vmem:[%s527 + $0x18] sm:$0xff]
    %532 = vrot.lane.b32.xlu0 %v415, 127
    %v533 = vpop.permute.xlu0 %532
    %534 = vrot.lane.b32.xlu0 %v417, 127
    %v535 = vpop.permute.xlu0 %534
    %536 = vrot.lane.b32.xlu0 %v416, 127
    %v537 = vpop.permute.xlu0 %536
    %538 = vrot.lane.b32.xlu0 %v418, 127
    %v539 = vpop.permute.xlu0 %538
    %v540 = vsel %vm130, %v533, %v537
    %v541 = vsel %vm130, %v535, %v539
    %v542 = vsel %vm130, %v537, %v533
    %v543 = vsel %vm130, %v539, %v535
    %v544 = vmul.f32 %v528, %v540
    %v545 = vmul.f32 %v529, %v542
    %v546 = vmul.f32 %v530, %v541
    %v547 = vmul.f32 %v531, %v543
    %v548 = vadd.f32 %v523, %v544
    %v549 = vadd.f32 %v524, %v545
    %v550 = vadd.f32 %v525, %v546
    %v551 = vadd.f32 %v526, %v547
    %s552 = scalar_lea.vmem [#allocation6], 192
    %v553 = vld [vmem:[%s552] sm:$0xff]
    %v554 = vld [vmem:[%s552 + $0x8] sm:$0xff]
    %v555 = vld [vmem:[%s552 + $0x10] sm:$0xff]
    %v556 = vld [vmem:[%s552 + $0x18] sm:$0xff]
    %557 = vrot.lane.b32.xlu0 %v415, 113
    %v558 = vpop.permute.xlu0 %557
    %559 = vrot.lane.b32.xlu0 %v417, 113
    %v560 = vpop.permute.xlu0 %559
    %561 = vrot.lane.b32.xlu0 %v416, 113
    %v562 = vpop.permute.xlu0 %561
    %563 = vrot.lane.b32.xlu0 %v418, 113
    %v564 = vpop.permute.xlu0 %563
    %v565 = vsel %vm144, %v558, %v562
    %v566 = vsel %vm144, %v560, %v564
    %v567 = vsel %vm144, %v562, %v558
    %v568 = vsel %vm144, %v564, %v560
    %v569 = vmul.f32 %v553, %v565
    %v570 = vmul.f32 %v554, %v567
    %v571 = vmul.f32 %v555, %v566
    %v572 = vmul.f32 %v556, %v568
    %v573 = vadd.f32 %v548, %v569
    %v574 = vadd.f32 %v549, %v570
    %v575 = vadd.f32 %v550, %v571
    %v576 = vadd.f32 %v551, %v572
    %s577 = scalar_lea.vmem [#allocation6], 224
    %v578 = vld [vmem:[%s577] sm:$0xff]
    %v579 = vld [vmem:[%s577 + $0x8] sm:$0xff]
    %v580 = vld [vmem:[%s577 + $0x10] sm:$0xff]
    %v581 = vld [vmem:[%s577 + $0x18] sm:$0xff]
    %582 = vrot.lane.b32.xlu0 %v415, 112
    %v583 = vpop.permute.xlu0 %582
    %584 = vrot.lane.b32.xlu0 %v417, 112
    %v585 = vpop.permute.xlu0 %584
    %586 = vrot.lane.b32.xlu0 %v416, 112
    %v587 = vpop.permute.xlu0 %586
    %588 = vrot.lane.b32.xlu0 %v418, 112
    %v589 = vpop.permute.xlu0 %588
    %v590 = vsel %vm158, %v583, %v587
    %v591 = vsel %vm158, %v585, %v589
    %v592 = vsel %vm158, %v587, %v583
    %v593 = vsel %vm158, %v589, %v585
    %v594 = vmul.f32 %v578, %v590
    %v595 = vmul.f32 %v579, %v592
    %v596 = vmul.f32 %v580, %v591
    %v597 = vmul.f32 %v581, %v593
    %v598 = vadd.f32 %v573, %v594
    %v599 = vadd.f32 %v574, %v595
    %v600 = vadd.f32 %v575, %v596
    %v601 = vadd.f32 %v576, %v597
    %s602 = scalar_lea.vmem [#allocation6], 256
    %v603 = vld [vmem:[%s602] sm:$0xff]
    %v604 = vld [vmem:[%s602 + $0x8] sm:$0xff]
    %v605 = vld [vmem:[%s602 + $0x10] sm:$0xff]
    %v606 = vld [vmem:[%s602 + $0x18] sm:$0xff]
    %607 = vrot.lane.b32.xlu0 %v415, 111
    %v608 = vpop.permute.xlu0 %607
    %609 = vrot.lane.b32.xlu0 %v417, 111
    %v610 = vpop.permute.xlu0 %609
    %611 = vrot.lane.b32.xlu0 %v416, 111
    %v612 = vpop.permute.xlu0 %611
    %613 = vrot.lane.b32.xlu0 %v418, 111
    %v614 = vpop.permute.xlu0 %613
    %v615 = vsel %vm172, %v608, %v612
    %v616 = vsel %vm172, %v610, %v614
    %v617 = vsel %vm172, %v612, %v608
    %v618 = vsel %vm172, %v614, %v610
    %v619 = vmul.f32 %v603, %v615
    %v620 = vmul.f32 %v604, %v617
    %v621 = vmul.f32 %v605, %v616
    %v622 = vmul.f32 %v606, %v618
    %v623 = vadd.f32 %v598, %v619
    %v624 = vadd.f32 %v599, %v620
    %v625 = vadd.f32 %v600, %v621
    %v626 = vadd.f32 %v601, %v622
    %v627 = vld [vmem:[%s5] sm:$0xf]
    %v628 = vld [vmem:[%s6] sm:$0xf]
    %630 = vset.pattern.permute.xlu0 0
    %631 = vperm.xlu0 %630, %v627
    %v632 = vpop.permute.xlu0 %631
    %v634 = vperm.slane %v623, 0
    %v635 = vperm.slane %v624, 0
    %v636 = vmul.f32 %v632, %v634
    %v637 = vmul.f32 %v632, %v635
    %638 = vset.pattern.permute.xlu0 1
    %639 = vperm.xlu0 %638, %v627
    %v640 = vpop.permute.xlu0 %639
    %v642 = vperm.slane %v623, 1
    %v643 = vperm.slane %v624, 1
    %v644 = vmul.f32 %v640, %v642
    %v645 = vmul.f32 %v640, %v643
    %v646 = vadd.f32 %v636, %v644
    %v647 = vadd.f32 %v637, %v645
    %648 = vset.pattern.permute.xlu0 2
    %649 = vperm.xlu0 %648, %v627
    %v650 = vpop.permute.xlu0 %649
    %v652 = vperm.slane %v623, 2
    %v653 = vperm.slane %v624, 2
    %v654 = vmul.f32 %v650, %v652
    %v655 = vmul.f32 %v650, %v653
    %v656 = vadd.f32 %v646, %v654
    %v657 = vadd.f32 %v647, %v655
    %658 = vset.pattern.permute.xlu0 3
    %659 = vperm.xlu0 %658, %v627
    %v660 = vpop.permute.xlu0 %659
    %v662 = vperm.slane %v623, 3
    %v663 = vperm.slane %v624, 3
    %v664 = vmul.f32 %v660, %v662
    %v665 = vmul.f32 %v660, %v663
    %v666 = vadd.f32 %v656, %v664
    %v667 = vadd.f32 %v657, %v665
    %668 = vset.pattern.permute.xlu0 4
    %669 = vperm.xlu0 %668, %v627
    %v670 = vpop.permute.xlu0 %669
    %v672 = vperm.slane %v623, 4
    %v673 = vperm.slane %v624, 4
    %v674 = vmul.f32 %v670, %v672
    %v675 = vmul.f32 %v670, %v673
    %v676 = vadd.f32 %v666, %v674
    %v677 = vadd.f32 %v667, %v675
    %678 = vset.pattern.permute.xlu0 5
    %679 = vperm.xlu0 %678, %v627
    %v680 = vpop.permute.xlu0 %679
    %v682 = vperm.slane %v623, 5
    %v683 = vperm.slane %v624, 5
    %v684 = vmul.f32 %v680, %v682
    %v685 = vmul.f32 %v680, %v683
    %v686 = vadd.f32 %v676, %v684
    %v687 = vadd.f32 %v677, %v685
    %688 = vset.pattern.permute.xlu0 6
    %689 = vperm.xlu0 %688, %v627
    %v690 = vpop.permute.xlu0 %689
    %v692 = vperm.slane %v623, 6
    %v693 = vperm.slane %v624, 6
    %v694 = vmul.f32 %v690, %v692
    %v695 = vmul.f32 %v690, %v693
    %v696 = vadd.f32 %v686, %v694
    %v697 = vadd.f32 %v687, %v695
    %698 = vset.pattern.permute.xlu0 7
    %699 = vperm.xlu0 %698, %v627
    %v700 = vpop.permute.xlu0 %699
    %v702 = vperm.slane %v623, 7
    %v703 = vperm.slane %v624, 7
    %v704 = vmul.f32 %v700, %v702
    %v705 = vmul.f32 %v700, %v703
    %v706 = vadd.f32 %v696, %v704
    %v707 = vadd.f32 %v697, %v705
    %709 = vset.pattern.permute.xlu0 0
    %710 = vperm.xlu0 %709, %v628
    %v711 = vpop.permute.xlu0 %710
    %v713 = vadd.f32 %v706, %v711
    %v714 = vadd.f32 %v707, %v711
    %715 = vst [vmem:[#allocation8] sm:$0xf] %v713
    %716 = vst [vmem:[#allocation8 + $0x8] sm:$0xf] %v714
    %v717 = vperm.slane %v625, 0
    %v718 = vperm.slane %v626, 0
    %v719 = vmul.f32 %v632, %v717
    %v720 = vmul.f32 %v632, %v718
    %v721 = vperm.slane %v625, 1
    %v722 = vperm.slane %v626, 1
    %v723 = vmul.f32 %v640, %v721
    %v724 = vmul.f32 %v640, %v722
    %v725 = vadd.f32 %v719, %v723
    %v726 = vadd.f32 %v720, %v724
    %v727 = vperm.slane %v625, 2
    %v728 = vperm.slane %v626, 2
    %v729 = vmul.f32 %v650, %v727
    %v730 = vmul.f32 %v650, %v728
    %v731 = vadd.f32 %v725, %v729
    %v732 = vadd.f32 %v726, %v730
    %v733 = vperm.slane %v625, 3
    %v734 = vperm.slane %v626, 3
    %v735 = vmul.f32 %v660, %v733
    %v736 = vmul.f32 %v660, %v734
    %v737 = vadd.f32 %v731, %v735
    %v738 = vadd.f32 %v732, %v736
    %v739 = vperm.slane %v625, 4
    %v740 = vperm.slane %v626, 4
    %v741 = vmul.f32 %v670, %v739
    %v742 = vmul.f32 %v670, %v740
    %v743 = vadd.f32 %v737, %v741
    %v744 = vadd.f32 %v738, %v742
    %v745 = vperm.slane %v625, 5
    %v746 = vperm.slane %v626, 5
    %v747 = vmul.f32 %v680, %v745
    %v748 = vmul.f32 %v680, %v746
    %v749 = vadd.f32 %v743, %v747
    %v750 = vadd.f32 %v744, %v748
    %v751 = vperm.slane %v625, 6
    %v752 = vperm.slane %v626, 6
    %v753 = vmul.f32 %v690, %v751
    %v754 = vmul.f32 %v690, %v752
    %v755 = vadd.f32 %v749, %v753
    %v756 = vadd.f32 %v750, %v754
    %v757 = vperm.slane %v625, 7
    %v758 = vperm.slane %v626, 7
    %v759 = vmul.f32 %v700, %v757
    %v760 = vmul.f32 %v700, %v758
    %v761 = vadd.f32 %v755, %v759
    %v762 = vadd.f32 %v756, %v760
    %v763 = vadd.f32 %v761, %v711
    %v764 = vadd.f32 %v762, %v711
    %v767 = vrot.slane %v763, 4
    %v768 = vrot.slane %v764, 4
    %771 = vst [vmem:[#allocation8] sm:$0xf0] %v767
    %772 = vst [vmem:[#allocation8 + $0x8] sm:$0xf0] %v768
    // Predicated region
    $region38: #{tpu_custom_call.1} parent=1 // pred_check
      _
    $region39: #{tpu_custom_call.1} parent=1 // pred_check_branch
      %774 = sbr.rel (0) target = $region41
    $region40: #{tpu_custom_call.1} parent=1 // pred_region
      %776 = vsyncadd [#allocation5], 0
      %s778 = sshll.u32 [#allocation8], 4
      %s779 = int_to_ptr.vmem [resolvable:$true] %s778
      %s780 = sshll.u32 %s7, 4
      %s781 = int_to_ptr.hbm [resolvable:$true] %s780
      %783 = dma.vmem_to_hbm [thread:$0]  %s779, 256, %s781, [#allocation5]
    $region41: #{tpu_custom_call.1} parent=1 // pred_fallthru
      _
    // Predicated region
    $region42: #{tpu_custom_call.1} parent=1 // pred_check
      _
    $region43: #{tpu_custom_call.1} parent=1 // pred_check_branch
      %785 = sbr.rel (0) target = $region45
    $region44: #{tpu_custom_call.1} parent=1 // pred_region
      %787 = dma.done [#allocation5], 256
    $region45: #{tpu_custom_call.1} parent=1 // pred_fallthru
      _
    %788 = vsyncpa [#allocation4], 1
    %789 = vsyncpa [#allocation7], 1
    %790 = vsyncpa [#allocation5], 1

</llo_original>
